<compile_context>
chip_gen: v5e
topology: v5e:2x2
jax: 0.10.0
libtpu: 0.0.40
codegen_flags: <defaults>
</compile_context>

<pallas_src>
import functools

import jax
import jax.numpy as jnp
import numpy as np
from jax import lax
from jax.experimental import pallas as pl
from jax.experimental.pallas import tpu as pltpu


def _tree_lstm_kernel(idx_ref,                       # SMEM (B_pad*L,) int32, scalar-prefetched
                      x_ref,                         # (B_BLK, L, D)  this block's inputs
                      adj_ref,                       # (B_BLK, N, N)  child adjacency masks
                      w_ref,                         # (D+H, 4H)      fused gate weights
                      b_ref,                         # (1, 4H)        fused (pre-summed) bias
                      state_ref,                     # (B_BLK, N, 2H) packed [c || h] output
                      *, hidden_dim, b_blk, seq_len):
    g = pl.program_id(0)
    H = hidden_dim
    L = seq_len

    # Output doubles as the persistent packed node state (accumulator pattern).
    state_ref[...] = jnp.zeros(state_ref.shape, state_ref.dtype)

    # Hoist constants out of the step loop.
    w = w_ref[...]                                   # (D+H, 4H)
    bias = b_ref[...]                                # (1, 4H)
    lane = lax.broadcasted_iota(jnp.int32, (1, 4 * H), 1)
    u_mask = jnp.logical_and(lane >= 2 * H, lane < 3 * H)   # tanh lanes (gate u)

    base = g * (b_blk * L)

    def step(s, carry):
        # Per-tree node indices for this step (scalar SMEM reads).
        idxs = [idx_ref[base + bb * L + s] for bb in range(b_blk)]

        # Gather this step's [x | sum_child_h] rows for every tree in the block
        # and the packed child sums [sum_c | sum_h] via one (1,N)@(N,2H) dot each.
        rows, sum_c_rows = [], []
        for bb in range(b_blk):
            idx = idxs[bb]
            x = x_ref[bb, pl.ds(idx, 1), :]                      # (1, D)
            cm = adj_ref[bb, pl.ds(idx, 1), :]                   # (1, N)
            sums = jnp.dot(cm, state_ref[bb],
                           preferred_element_type=jnp.float32)   # (1, 2H) = [sum_c | sum_h]
            sum_c_rows.append(sums[:, :H])
            rows.append(jnp.concatenate([x, sums[:, H:]], axis=1))   # (1, D+H)

        lhs = rows[0] if b_blk == 1 else jnp.concatenate(rows, axis=0)               # (B_BLK, D+H)
        sum_c = sum_c_rows[0] if b_blk == 1 else jnp.concatenate(sum_c_rows, axis=0)  # (B_BLK, H)

        # Single fused gate matmul for the whole tree block: columns [i | o | u | f].
        gates = jnp.dot(lhs, w, preferred_element_type=jnp.float32) + bias            # (B_BLK, 4H)

        # Whole-vreg activations: tanh on the u lanes, sigmoid elsewhere.
        act = jnp.where(u_mask, jnp.tanh(gates), jax.nn.sigmoid(gates))
        i = act[:, 0 * H:1 * H]
        o = act[:, 1 * H:2 * H]
        u = act[:, 2 * H:3 * H]
        f = act[:, 3 * H:4 * H]

        c = i * u + f * sum_c                       # (B_BLK, H)
        h = o * jnp.tanh(c)
        ch = jnp.concatenate([c, h], axis=1)        # (B_BLK, 2H) packed rows

        # One 64-lane indexed row store per tree (no full-state blend).
        for bb in range(b_blk):
            state_ref[bb, pl.ds(idxs[bb], 1), :] = ch[bb:bb + 1, :]
        return carry

    unroll = True if L <= 16 else 8
    lax.fori_loop(0, L, step, 0, unroll=unroll)


def dt_tree_lstm_forward(inputs, indexes, child_adj, params, hidden_dim, *,
                         batch_block=None):
    """inputs: (L, B, D) f32; indexes: (L, B) int; child_adj: (B, N, N) f32.

    Returns (cells, hiddens), each (N, B, H), matching DTTreeLSTM.forward
    (eval mode: dropout is identity).
    """
    L, B, D = inputs.shape
    N = child_adj.shape[1]
    H = hidden_dim

    (wioux_t, bioux, wiouh_t, biouh, wfx_t, bfx, wfh_t, bfh) = params

    # Fuse all four Linears into ONE (D+H, 4H) matmul with gate order [i | o | u | f],
    # and pre-sum the x- and h-path biases into a single (1, 4H) constant.
    wx_all = jnp.concatenate([wioux_t, wfx_t], axis=1)        # (D, 4H)
    wh_all = jnp.concatenate([wiouh_t, wfh_t], axis=1)        # (H, 4H)
    w_all = jnp.concatenate([wx_all, wh_all], axis=0)         # (D+H, 4H)
    b_all = (jnp.concatenate([bioux, bfx], axis=1)
             + jnp.concatenate([biouh, bfh], axis=1))         # (1, 4H)

    # Trees per grid point: fills MXU sublanes; B >= 16 also gives >= 2 balanced
    # grid points for the 2 TensorCores on v7x.
    B_BLK = min(B, 8) if batch_block is None else int(batch_block)
    n_blocks = -(-B // B_BLK)
    B_pad = n_blocks * B_BLK

    # NOTE: callers that can supply batch-major (B, L, D) inputs / consume
    # (B, N, H) outputs can skip these transposes entirely (they are extra
    # full HBM passes outside the kernel).
    inputs_bt = jnp.transpose(jnp.asarray(inputs, jnp.float32), (1, 0, 2))   # (B, L, D)
    adj = jnp.asarray(child_adj, jnp.float32)                                # (B, N, N)
    idx_bt = jnp.asarray(indexes, jnp.int32).T                               # (B, L)

    if B_pad != B:
        pad = B_pad - B
        inputs_bt = jnp.pad(inputs_bt, ((0, pad), (0, 0), (0, 0)))
        adj = jnp.pad(adj, ((0, pad), (0, 0), (0, 0)))
        idx_bt = jnp.pad(idx_bt, ((0, pad), (0, 0)))

    idx_flat = idx_bt.reshape(-1)                                            # (B_pad * L,)

    kernel = functools.partial(_tree_lstm_kernel,
                               hidden_dim=H, b_blk=B_BLK, seq_len=L)

    state = pl.pallas_call(
        kernel,
        out_shape=jax.ShapeDtypeStruct((B_pad, N, 2 * H), jnp.float32),
        grid_spec=pltpu.PrefetchScalarGridSpec(
            num_scalar_prefetch=1,              # idx_flat -> SMEM
            grid=(n_blocks,),
            in_specs=[
                pl.BlockSpec((B_BLK, L, D), lambda g, idx: (g, 0, 0)),   # inputs (tree block)
                pl.BlockSpec((B_BLK, N, N), lambda g, idx: (g, 0, 0)),   # child adjacency
                pl.BlockSpec((D + H, 4 * H), lambda g, idx: (0, 0)),     # fused gate weights
                pl.BlockSpec((1, 4 * H), lambda g, idx: (0, 0)),         # fused bias
            ],
            out_specs=pl.BlockSpec((B_BLK, N, 2 * H), lambda g, idx: (g, 0, 0)),
        ),
        compiler_params=pltpu.CompilerParams(
            dimension_semantics=("parallel",)),
    )(idx_flat, inputs_bt, adj, w_all, b_all)

    state = state[:B]                       # drop padded trees
    cells_bnh = state[..., :H]
    hid_bnh = state[..., H:]

    # Match PyTorch return: (cells, hiddens), each (N, B, H)
    return jnp.transpose(cells_bnh, (1, 0, 2)), jnp.transpose(hid_bnh, (1, 0, 2))


def _reference(inputs, indexes, child_adj, params, hidden_dim):
    """Pure NumPy replica of DTTreeLSTM.forward semantics (eval mode)."""
    (wioux_t, bioux, wiouh_t, biouh, wfx_t, bfx, wfh_t, bfh) = [np.asarray(p) for p in params]
    L, B, D = inputs.shape
    N = child_adj.shape[1]
    H = hidden_dim
    sig = lambda z: 1.0 / (1.0 + np.exp(-z))
    C = np.zeros((B, N, H), np.float32)
    Hs = np.zeros((B, N, H), np.float32)
    for s in range(L):
        for b in range(B):
            idx = int(indexes[s, b])
            x = np.asarray(inputs)[idx, b]
            mask = np.asarray(child_adj)[b, idx]
            sc_c = mask @ C[b]
            sc_h = mask @ Hs[b]
            iou = x @ wioux_t + bioux[0] + sc_h @ wiouh_t + biouh[0]
            i, o, u = sig(iou[:H]), sig(iou[H:2 * H]), np.tanh(iou[2 * H:])
            f = sig(sc_h @ wfh_t + bfh[0] + x @ wfx_t + bfx[0])
            c = i * u + f * sc_c
            h = o * np.tanh(c)
            C[b, idx] = c
            Hs[b, idx] = h
    return np.transpose(C, (1, 0, 2)), np.transpose(Hs, (1, 0, 2))


if __name__ == "__main__":
    # Small shapes: seq/n_nodes = 8, batch = 2, input_dim = 16, hidden = 32
    L = N = 8
    B = 2
    D = 16
    H = 32

    key = jax.random.PRNGKey(0)
    ks = jax.random.split(key, 9)

    def uinit(k, shape, fan_in):
        bound = 1.0 / np.sqrt(fan_in)
        return jax.random.uniform(k, shape, jnp.float32, -bound, bound)

    # PyTorch Linear(in, out): y = x @ W.T + b.  We store W transposed (in, out).
    wioux_t = uinit(ks[0], (D, 3 * H), D)
    bioux = uinit(ks[1], (1, 3 * H), D)
    wiouh_t = uinit(ks[2], (H, 3 * H), H)
    biouh = uinit(ks[3], (1, 3 * H), H)
    wfx_t = uinit(ks[4], (D, H), D)
    bfx = uinit(ks[5], (1, H), D)
    wfh_t = uinit(ks[6], (H, H), H)
    bfh = uinit(ks[7], (1, H), H)
    params = (wioux_t, bioux, wiouh_t, biouh, wfx_t, bfx, wfh_t, bfh)

    inputs = jax.random.normal(ks[8], (L, B, D), jnp.float32)

    # Trees encoded as parent pointers (root parent = -1); children must be
    # processed before parents in `indexes` (bottom-up order, like the module).
    parents = [
        [5, 5, 6, 6, 6, 7, 7, -1],   # batch 0: small balanced-ish tree
        [1, 2, 3, 4, 5, 6, 7, -1],   # batch 1: chain
    ]
    child_adj = np.zeros((B, N, N), np.float32)
    for b in range(B):
        for child, par in enumerate(parents[b]):
            if par >= 0:
                child_adj[b, par, child] = 1.0

    indexes = np.stack([
        np.array([2, 0, 4, 1, 3, 6, 5, 7], np.int32),   # valid bottom-up order, b=0
        np.arange(N, dtype=np.int32),                   # chain order, b=1
    ], axis=1)                                          # (L, B)

    cells, hiddens = dt_tree_lstm_forward(inputs, indexes, child_adj, params, H)
    jax.block_until_ready((cells, hiddens))

    ref_cells, ref_hiddens = _reference(np.asarray(inputs), indexes, child_adj, params, H)
    np.testing.assert_allclose(np.asarray(cells), ref_cells, rtol=1e-4, atol=1e-4)
    np.testing.assert_allclose(np.asarray(hiddens), ref_hiddens, rtol=1e-4, atol=1e-4)

    print("KERNEL_OK")
</pallas_src>

<mosaic_0001>
module attributes {stable_mosaic.version = 11 : i64} {
  func.func @_tree_lstm_kernel(%arg0: i32, %arg1: memref<16xi32, #tpu.memory_space<smem>>, %arg2: memref<2x8x16xf32, #tpu.memory_space<vmem>>, %arg3: memref<2x8x8xf32, #tpu.memory_space<vmem>>, %arg4: memref<48x128xf32, #tpu.memory_space<vmem>>, %arg5: memref<1x128xf32, #tpu.memory_space<vmem>>, %arg6: memref<2x8x64xf32, #tpu.memory_space<vmem>>) attributes {dimension_semantics = [#tpu.dimension_semantics<parallel>], iteration_bounds = array<i64: 1>, scalar_prefetch = 1 : i64, scratch_operands = 0 : i64, tpu.core_type = #tpu.core_type<tc>, window_params = [{transform_indices = @transform_0, window_bounds = array<i64: 2, 8, 16>}, {transform_indices = @transform_1, window_bounds = array<i64: 2, 8, 8>}, {pipeline_mode = #tpu.pipeline_mode<synchronous>, transform_indices = @transform_2, window_bounds = array<i64: 48, 128>}, {pipeline_mode = #tpu.pipeline_mode<synchronous>, transform_indices = @transform_3, window_bounds = array<i64: 1, 128>}, {transform_indices = @transform_4, window_bounds = array<i64: 2, 8, 64>}]} {
    %cst = arith.constant 0.000000e+00 : f32
    %0 = vector.broadcast %cst : f32 to vector<2x8x64xf32>
    %c0 = arith.constant 0 : index
    %c0_0 = arith.constant 0 : index
    %c0_1 = arith.constant 0 : index
    %1 = vector.load %arg6[%c0, %c0_0, %c0_1] : memref<2x8x64xf32, #tpu.memory_space<vmem>>, vector<2x8x64xf32>
    tpu.vector_store %arg6[%c0, %c0_0, %c0_1], %0 {strides = array<i32>} : memref<2x8x64xf32, #tpu.memory_space<vmem>>, vector<2x8x64xf32>,
    %c0_2 = arith.constant 0 : index
    %c0_3 = arith.constant 0 : index
    %2 = vector.load %arg4[%c0_2, %c0_3] : memref<48x128xf32, #tpu.memory_space<vmem>>, vector<48x128xf32>
    %c0_4 = arith.constant 0 : index
    %c0_5 = arith.constant 0 : index
    %3 = vector.load %arg5[%c0_4, %c0_5] : memref<1x128xf32, #tpu.memory_space<vmem>>, vector<1x128xf32>
    %4 = tpu.iota {dimensions = array<i32: 1>} : vector<1x128xi32>
    %c64_i32 = arith.constant 64 : i32
    %5 = vector.broadcast %c64_i32 : i32 to vector<1x128xi32>
    %6 = arith.cmpi sge, %4, %5 : vector<1x128xi32>
    %c96_i32 = arith.constant 96 : i32
    %7 = vector.broadcast %c96_i32 : i32 to vector<1x128xi32>
    %8 = arith.cmpi slt, %4, %7 : vector<1x128xi32>
    %9 = arith.andi %6, %8 : vector<1x128xi1>
    %c16_i32 = arith.constant 16 : i32
    %10 = arith.muli %arg0, %c16_i32 : i32
    %c0_i32 = arith.constant 0 : i32
    %c0_i32_6 = arith.constant 0 : i32
    %11 = arith.addi %10, %c0_i32_6 : i32
    %12 = arith.addi %11, %c0_i32 : i32
    %13 = arith.index_cast %12 : i32 to index
    %14 = memref.load %arg1[%13] : memref<16xi32, #tpu.memory_space<smem>>
    %c8_i32 = arith.constant 8 : i32
    %15 = arith.addi %10, %c8_i32 : i32
    %16 = arith.addi %15, %c0_i32 : i32
    %17 = arith.index_cast %16 : i32 to index
    %18 = memref.load %arg1[%17] : memref<16xi32, #tpu.memory_space<smem>>
    %c0_7 = arith.constant 0 : index
    %19 = arith.index_cast %14 : i32 to index
    %c0_8 = arith.constant 0 : index
    %20 = vector.load %arg2[%c0_7, %19, %c0_8] : memref<2x8x16xf32, #tpu.memory_space<vmem>>, vector<1x1x16xf32>
    %21 = vector.shape_cast %20 : vector<1x1x16xf32> to vector<1x16xf32>
    %c0_9 = arith.constant 0 : index
    %22 = arith.index_cast %14 : i32 to index
    %c0_10 = arith.constant 0 : index
    %23 = vector.load %arg3[%c0_9, %22, %c0_10] : memref<2x8x8xf32, #tpu.memory_space<vmem>>, vector<1x1x8xf32>
    %24 = vector.shape_cast %23 : vector<1x1x8xf32> to vector<1x8xf32>
    %c0_11 = arith.constant 0 : index
    %c0_12 = arith.constant 0 : index
    %c0_13 = arith.constant 0 : index
    %25 = vector.load %arg6[%c0_11, %c0_12, %c0_13] : memref<2x8x64xf32, #tpu.memory_space<vmem>>, vector<1x8x64xf32>
    %26 = vector.shape_cast %25 : vector<1x8x64xf32> to vector<8x64xf32>
    %cst_14 = arith.constant dense<0.000000e+00> : vector<1x64xf32>
    %27 = tpu.matmul %24, %26, %cst_14 {dimension_numbers = #tpu.dot_dimension_numbers<[1], [0], [0], [1], [0, 0, 1, 1], [], []>} : vector<1x8xf32>, vector<8x64xf32>, vector<1x64xf32> -> vector<1x64xf32>
    %28 = vector.extract_strided_slice %27 {offsets = [0, 0], sizes = [1, 32], strides = [1, 1]} : vector<1x64xf32> to vector<1x32xf32>
    %29 = vector.extract_strided_slice %27 {offsets = [0, 32], sizes = [1, 32], strides = [1, 1]} : vector<1x64xf32> to vector<1x32xf32>
    %30 = tpu.concatenate %21, %29 in 1 : vector<1x16xf32>, vector<1x32xf32> -> vector<1x48xf32>
    %c1 = arith.constant 1 : index
    %31 = arith.index_cast %18 : i32 to index
    %c0_15 = arith.constant 0 : index
    %32 = vector.load %arg2[%c1, %31, %c0_15] : memref<2x8x16xf32, #tpu.memory_space<vmem>>, vector<1x1x16xf32>
    %33 = vector.shape_cast %32 : vector<1x1x16xf32> to vector<1x16xf32>
    %c1_16 = arith.constant 1 : index
    %34 = arith.index_cast %18 : i32 to index
    %c0_17 = arith.constant 0 : index
    %35 = vector.load %arg3[%c1_16, %34, %c0_17] : memref<2x8x8xf32, #tpu.memory_space<vmem>>, vector<1x1x8xf32>
    %36 = vector.shape_cast %35 : vector<1x1x8xf32> to vector<1x8xf32>
    %c1_18 = arith.constant 1 : index
    %c0_19 = arith.constant 0 : index
    %c0_20 = arith.constant 0 : index
    %37 = vector.load %arg6[%c1_18, %c0_19, %c0_20] : memref<2x8x64xf32, #tpu.memory_space<vmem>>, vector<1x8x64xf32>
    %38 = vector.shape_cast %37 : vector<1x8x64xf32> to vector<8x64xf32>
    %cst_21 = arith.constant dense<0.000000e+00> : vector<1x64xf32>
    %39 = tpu.matmul %36, %38, %cst_21 {dimension_numbers = #tpu.dot_dimension_numbers<[1], [0], [0], [1], [0, 0, 1, 1], [], []>} : vector<1x8xf32>, vector<8x64xf32>, vector<1x64xf32> -> vector<1x64xf32>
    %40 = vector.extract_strided_slice %39 {offsets = [0, 0], sizes = [1, 32], strides = [1, 1]} : vector<1x64xf32> to vector<1x32xf32>
    %41 = vector.extract_strided_slice %39 {offsets = [0, 32], sizes = [1, 32], strides = [1, 1]} : vector<1x64xf32> to vector<1x32xf32>
    %42 = tpu.concatenate %33, %41 in 1 : vector<1x16xf32>, vector<1x32xf32> -> vector<1x48xf32>
    %43 = tpu.concatenate %30, %42 in 0 : vector<1x48xf32>, vector<1x48xf32> -> vector<2x48xf32>
    %44 = tpu.concatenate %28, %40 in 0 : vector<1x32xf32>, vector<1x32xf32> -> vector<2x32xf32>
    %cst_22 = arith.constant dense<0.000000e+00> : vector<2x128xf32>
    %45 = tpu.matmul %43, %2, %cst_22 {dimension_numbers = #tpu.dot_dimension_numbers<[1], [0], [0], [1], [0, 0, 1, 1], [], []>} : vector<2x48xf32>, vector<48x128xf32>, vector<2x128xf32> -> vector<2x128xf32>
    %46 = vector.broadcast %3 : vector<1x128xf32> to vector<2x128xf32>
    %47 = arith.addf %45, %46 : vector<2x128xf32>
    %48 = math.tanh %47 : vector<2x128xf32>
    %49 = arith.negf %47 : vector<2x128xf32>
    %50 = math.exp %49 : vector<2x128xf32>
    %cst_23 = arith.constant 1.000000e+00 : f32
    %51 = vector.broadcast %cst_23 : f32 to vector<2x128xf32>
    %52 = arith.addf %51, %50 : vector<2x128xf32>
    %53 = arith.divf %51, %52 : vector<2x128xf32>
    %54 = vector.shape_cast %9 : vector<1x128xi1> to vector<1x128xi1>
    %55 = vector.broadcast %54 : vector<1x128xi1> to vector<2x128xi1>
    %56 = arith.select %55, %48, %53 : vector<2x128xi1>, vector<2x128xf32>
    %57 = vector.extract_strided_slice %56 {offsets = [0, 0], sizes = [2, 32], strides = [1, 1]} : vector<2x128xf32> to vector<2x32xf32>
    %58 = vector.extract_strided_slice %56 {offsets = [0, 32], sizes = [2, 32], strides = [1, 1]} : vector<2x128xf32> to vector<2x32xf32>
    %59 = vector.extract_strided_slice %56 {offsets = [0, 64], sizes = [2, 32], strides = [1, 1]} : vector<2x128xf32> to vector<2x32xf32>
    %60 = vector.extract_strided_slice %56 {offsets = [0, 96], sizes = [2, 32], strides = [1, 1]} : vector<2x128xf32> to vector<2x32xf32>
    %61 = arith.mulf %57, %59 : vector<2x32xf32>
    %62 = arith.mulf %60, %44 : vector<2x32xf32>
    %63 = arith.addf %61, %62 : vector<2x32xf32>
    %64 = math.tanh %63 : vector<2x32xf32>
    %65 = arith.mulf %58, %64 : vector<2x32xf32>
    %66 = tpu.concatenate %63, %65 in 1 : vector<2x32xf32>, vector<2x32xf32> -> vector<2x64xf32>
    %67 = vector.extract_strided_slice %66 {offsets = [0, 0], sizes = [1, 64], strides = [1, 1]} : vector<2x64xf32> to vector<1x64xf32>
    %c0_24 = arith.constant 0 : index
    %68 = arith.index_cast %14 : i32 to index
    %c0_25 = arith.constant 0 : index
    %69 = vector.load %arg6[%c0_24, %68, %c0_25] : memref<2x8x64xf32, #tpu.memory_space<vmem>>, vector<1x1x64xf32>
    %70 = vector.shape_cast %69 : vector<1x1x64xf32> to vector<1x64xf32>
    %71 = vector.shape_cast %67 : vector<1x64xf32> to vector<1x1x64xf32>
    tpu.vector_store %arg6[%c0_24, %68, %c0_25], %71 {strides = array<i32>} : memref<2x8x64xf32, #tpu.memory_space<vmem>>, vector<1x1x64xf32>,
    %72 = vector.extract_strided_slice %66 {offsets = [1, 0], sizes = [1, 64], strides = [1, 1]} : vector<2x64xf32> to vector<1x64xf32>
    %c1_26 = arith.constant 1 : index
    %73 = arith.index_cast %18 : i32 to index
    %c0_27 = arith.constant 0 : index
    %74 = vector.load %arg6[%c1_26, %73, %c0_27] : memref<2x8x64xf32, #tpu.memory_space<vmem>>, vector<1x1x64xf32>
    %75 = vector.shape_cast %74 : vector<1x1x64xf32> to vector<1x64xf32>
    %76 = vector.shape_cast %72 : vector<1x64xf32> to vector<1x1x64xf32>
    tpu.vector_store %arg6[%c1_26, %73, %c0_27], %76 {strides = array<i32>} : memref<2x8x64xf32, #tpu.memory_space<vmem>>, vector<1x1x64xf32>,
    %c1_i32 = arith.constant 1 : i32
    %c0_i32_28 = arith.constant 0 : i32
    %77 = arith.addi %10, %c0_i32_28 : i32
    %78 = arith.addi %77, %c1_i32 : i32
    %79 = arith.index_cast %78 : i32 to index
    %80 = memref.load %arg1[%79] : memref<16xi32, #tpu.memory_space<smem>>
    %c8_i32_29 = arith.constant 8 : i32
    %81 = arith.addi %10, %c8_i32_29 : i32
    %82 = arith.addi %81, %c1_i32 : i32
    %83 = arith.index_cast %82 : i32 to index
    %84 = memref.load %arg1[%83] : memref<16xi32, #tpu.memory_space<smem>>
    %c0_30 = arith.constant 0 : index
    %85 = arith.index_cast %80 : i32 to index
    %c0_31 = arith.constant 0 : index
    %86 = vector.load %arg2[%c0_30, %85, %c0_31] : memref<2x8x16xf32, #tpu.memory_space<vmem>>, vector<1x1x16xf32>
    %87 = vector.shape_cast %86 : vector<1x1x16xf32> to vector<1x16xf32>
    %c0_32 = arith.constant 0 : index
    %88 = arith.index_cast %80 : i32 to index
    %c0_33 = arith.constant 0 : index
    %89 = vector.load %arg3[%c0_32, %88, %c0_33] : memref<2x8x8xf32, #tpu.memory_space<vmem>>, vector<1x1x8xf32>
    %90 = vector.shape_cast %89 : vector<1x1x8xf32> to vector<1x8xf32>
    %c0_34 = arith.constant 0 : index
    %c0_35 = arith.constant 0 : index
    %c0_36 = arith.constant 0 : index
    %91 = vector.load %arg6[%c0_34, %c0_35, %c0_36] : memref<2x8x64xf32, #tpu.memory_space<vmem>>, vector<1x8x64xf32>
    %92 = vector.shape_cast %91 : vector<1x8x64xf32> to vector<8x64xf32>
    %cst_37 = arith.constant dense<0.000000e+00> : vector<1x64xf32>
    %93 = tpu.matmul %90, %92, %cst_37 {dimension_numbers = #tpu.dot_dimension_numbers<[1], [0], [0], [1], [0, 0, 1, 1], [], []>} : vector<1x8xf32>, vector<8x64xf32>, vector<1x64xf32> -> vector<1x64xf32>
    %94 = vector.extract_strided_slice %93 {offsets = [0, 0], sizes = [1, 32], strides = [1, 1]} : vector<1x64xf32> to vector<1x32xf32>
    %95 = vector.extract_strided_slice %93 {offsets = [0, 32], sizes = [1, 32], strides = [1, 1]} : vector<1x64xf32> to vector<1x32xf32>
    %96 = tpu.concatenate %87, %95 in 1 : vector<1x16xf32>, vector<1x32xf32> -> vector<1x48xf32>
    %c1_38 = arith.constant 1 : index
    %97 = arith.index_cast %84 : i32 to index
    %c0_39 = arith.constant 0 : index
    %98 = vector.load %arg2[%c1_38, %97, %c0_39] : memref<2x8x16xf32, #tpu.memory_space<vmem>>, vector<1x1x16xf32>
    %99 = vector.shape_cast %98 : vector<1x1x16xf32> to vector<1x16xf32>
    %c1_40 = arith.constant 1 : index
    %100 = arith.index_cast %84 : i32 to index
    %c0_41 = arith.constant 0 : index
    %101 = vector.load %arg3[%c1_40, %100, %c0_41] : memref<2x8x8xf32, #tpu.memory_space<vmem>>, vector<1x1x8xf32>
    %102 = vector.shape_cast %101 : vector<1x1x8xf32> to vector<1x8xf32>
    %c1_42 = arith.constant 1 : index
    %c0_43 = arith.constant 0 : index
    %c0_44 = arith.constant 0 : index
    %103 = vector.load %arg6[%c1_42, %c0_43, %c0_44] : memref<2x8x64xf32, #tpu.memory_space<vmem>>, vector<1x8x64xf32>
    %104 = vector.shape_cast %103 : vector<1x8x64xf32> to vector<8x64xf32>
    %cst_45 = arith.constant dense<0.000000e+00> : vector<1x64xf32>
    %105 = tpu.matmul %102, %104, %cst_45 {dimension_numbers = #tpu.dot_dimension_numbers<[1], [0], [0], [1], [0, 0, 1, 1], [], []>} : vector<1x8xf32>, vector<8x64xf32>, vector<1x64xf32> -> vector<1x64xf32>
    %106 = vector.extract_strided_slice %105 {offsets = [0, 0], sizes = [1, 32], strides = [1, 1]} : vector<1x64xf32> to vector<1x32xf32>
    %107 = vector.extract_strided_slice %105 {offsets = [0, 32], sizes = [1, 32], strides = [1, 1]} : vector<1x64xf32> to vector<1x32xf32>
    %108 = tpu.concatenate %99, %107 in 1 : vector<1x16xf32>, vector<1x32xf32> -> vector<1x48xf32>
    %109 = tpu.concatenate %96, %108 in 0 : vector<1x48xf32>, vector<1x48xf32> -> vector<2x48xf32>
    %110 = tpu.concatenate %94, %106 in 0 : vector<1x32xf32>, vector<1x32xf32> -> vector<2x32xf32>
    %cst_46 = arith.constant dense<0.000000e+00> : vector<2x128xf32>
    %111 = tpu.matmul %109, %2, %cst_46 {dimension_numbers = #tpu.dot_dimension_numbers<[1], [0], [0], [1], [0, 0, 1, 1], [], []>} : vector<2x48xf32>, vector<48x128xf32>, vector<2x128xf32> -> vector<2x128xf32>
    %112 = vector.broadcast %3 : vector<1x128xf32> to vector<2x128xf32>
    %113 = arith.addf %111, %112 : vector<2x128xf32>
    %114 = math.tanh %113 : vector<2x128xf32>
    %115 = arith.negf %113 : vector<2x128xf32>
    %116 = math.exp %115 : vector<2x128xf32>
    %cst_47 = arith.constant 1.000000e+00 : f32
    %117 = vector.broadcast %cst_47 : f32 to vector<2x128xf32>
    %118 = arith.addf %117, %116 : vector<2x128xf32>
    %119 = arith.divf %117, %118 : vector<2x128xf32>
    %120 = vector.shape_cast %9 : vector<1x128xi1> to vector<1x128xi1>
    %121 = vector.broadcast %120 : vector<1x128xi1> to vector<2x128xi1>
    %122 = arith.select %121, %114, %119 : vector<2x128xi1>, vector<2x128xf32>
    %123 = vector.extract_strided_slice %122 {offsets = [0, 0], sizes = [2, 32], strides = [1, 1]} : vector<2x128xf32> to vector<2x32xf32>
    %124 = vector.extract_strided_slice %122 {offsets = [0, 32], sizes = [2, 32], strides = [1, 1]} : vector<2x128xf32> to vector<2x32xf32>
    %125 = vector.extract_strided_slice %122 {offsets = [0, 64], sizes = [2, 32], strides = [1, 1]} : vector<2x128xf32> to vector<2x32xf32>
    %126 = vector.extract_strided_slice %122 {offsets = [0, 96], sizes = [2, 32], strides = [1, 1]} : vector<2x128xf32> to vector<2x32xf32>
    %127 = arith.mulf %123, %125 : vector<2x32xf32>
    %128 = arith.mulf %126, %110 : vector<2x32xf32>
    %129 = arith.addf %127, %128 : vector<2x32xf32>
    %130 = math.tanh %129 : vector<2x32xf32>
    %131 = arith.mulf %124, %130 : vector<2x32xf32>
    %132 = tpu.concatenate %129, %131 in 1 : vector<2x32xf32>, vector<2x32xf32> -> vector<2x64xf32>
    %133 = vector.extract_strided_slice %132 {offsets = [0, 0], sizes = [1, 64], strides = [1, 1]} : vector<2x64xf32> to vector<1x64xf32>
    %c0_48 = arith.constant 0 : index
    %134 = arith.index_cast %80 : i32 to index
    %c0_49 = arith.constant 0 : index
    %135 = vector.load %arg6[%c0_48, %134, %c0_49] : memref<2x8x64xf32, #tpu.memory_space<vmem>>, vector<1x1x64xf32>
    %136 = vector.shape_cast %135 : vector<1x1x64xf32> to vector<1x64xf32>
    %137 = vector.shape_cast %133 : vector<1x64xf32> to vector<1x1x64xf32>
    tpu.vector_store %arg6[%c0_48, %134, %c0_49], %137 {strides = array<i32>} : memref<2x8x64xf32, #tpu.memory_space<vmem>>, vector<1x1x64xf32>,
    %138 = vector.extract_strided_slice %132 {offsets = [1, 0], sizes = [1, 64], strides = [1, 1]} : vector<2x64xf32> to vector<1x64xf32>
    %c1_50 = arith.constant 1 : index
    %139 = arith.index_cast %84 : i32 to index
    %c0_51 = arith.constant 0 : index
    %140 = vector.load %arg6[%c1_50, %139, %c0_51] : memref<2x8x64xf32, #tpu.memory_space<vmem>>, vector<1x1x64xf32>
    %141 = vector.shape_cast %140 : vector<1x1x64xf32> to vector<1x64xf32>
    %142 = vector.shape_cast %138 : vector<1x64xf32> to vector<1x1x64xf32>
    tpu.vector_store %arg6[%c1_50, %139, %c0_51], %142 {strides = array<i32>} : memref<2x8x64xf32, #tpu.memory_space<vmem>>, vector<1x1x64xf32>,
    %c2_i32 = arith.constant 2 : i32
    %c0_i32_52 = arith.constant 0 : i32
    %143 = arith.addi %10, %c0_i32_52 : i32
    %144 = arith.addi %143, %c2_i32 : i32
    %145 = arith.index_cast %144 : i32 to index
    %146 = memref.load %arg1[%145] : memref<16xi32, #tpu.memory_space<smem>>
    %c8_i32_53 = arith.constant 8 : i32
    %147 = arith.addi %10, %c8_i32_53 : i32
    %148 = arith.addi %147, %c2_i32 : i32
    %149 = arith.index_cast %148 : i32 to index
    %150 = memref.load %arg1[%149] : memref<16xi32, #tpu.memory_space<smem>>
    %c0_54 = arith.constant 0 : index
    %151 = arith.index_cast %146 : i32 to index
    %c0_55 = arith.constant 0 : index
    %152 = vector.load %arg2[%c0_54, %151, %c0_55] : memref<2x8x16xf32, #tpu.memory_space<vmem>>, vector<1x1x16xf32>
    %153 = vector.shape_cast %152 : vector<1x1x16xf32> to vector<1x16xf32>
    %c0_56 = arith.constant 0 : index
    %154 = arith.index_cast %146 : i32 to index
    %c0_57 = arith.constant 0 : index
    %155 = vector.load %arg3[%c0_56, %154, %c0_57] : memref<2x8x8xf32, #tpu.memory_space<vmem>>, vector<1x1x8xf32>
    %156 = vector.shape_cast %155 : vector<1x1x8xf32> to vector<1x8xf32>
    %c0_58 = arith.constant 0 : index
    %c0_59 = arith.constant 0 : index
    %c0_60 = arith.constant 0 : index
    %157 = vector.load %arg6[%c0_58, %c0_59, %c0_60] : memref<2x8x64xf32, #tpu.memory_space<vmem>>, vector<1x8x64xf32>
    %158 = vector.shape_cast %157 : vector<1x8x64xf32> to vector<8x64xf32>
    %cst_61 = arith.constant dense<0.000000e+00> : vector<1x64xf32>
    %159 = tpu.matmul %156, %158, %cst_61 {dimension_numbers = #tpu.dot_dimension_numbers<[1], [0], [0], [1], [0, 0, 1, 1], [], []>} : vector<1x8xf32>, vector<8x64xf32>, vector<1x64xf32> -> vector<1x64xf32>
    %160 = vector.extract_strided_slice %159 {offsets = [0, 0], sizes = [1, 32], strides = [1, 1]} : vector<1x64xf32> to vector<1x32xf32>
    %161 = vector.extract_strided_slice %159 {offsets = [0, 32], sizes = [1, 32], strides = [1, 1]} : vector<1x64xf32> to vector<1x32xf32>
    %162 = tpu.concatenate %153, %161 in 1 : vector<1x16xf32>, vector<1x32xf32> -> vector<1x48xf32>
    %c1_62 = arith.constant 1 : index
    %163 = arith.index_cast %150 : i32 to index
    %c0_63 = arith.constant 0 : index
    %164 = vector.load %arg2[%c1_62, %163, %c0_63] : memref<2x8x16xf32, #tpu.memory_space<vmem>>, vector<1x1x16xf32>
    %165 = vector.shape_cast %164 : vector<1x1x16xf32> to vector<1x16xf32>
    %c1_64 = arith.constant 1 : index
    %166 = arith.index_cast %150 : i32 to index
    %c0_65 = arith.constant 0 : index
    %167 = vector.load %arg3[%c1_64, %166, %c0_65] : memref<2x8x8xf32, #tpu.memory_space<vmem>>, vector<1x1x8xf32>
    %168 = vector.shape_cast %167 : vector<1x1x8xf32> to vector<1x8xf32>
    %c1_66 = arith.constant 1 : index
    %c0_67 = arith.constant 0 : index
    %c0_68 = arith.constant 0 : index
    %169 = vector.load %arg6[%c1_66, %c0_67, %c0_68] : memref<2x8x64xf32, #tpu.memory_space<vmem>>, vector<1x8x64xf32>
    %170 = vector.shape_cast %169 : vector<1x8x64xf32> to vector<8x64xf32>
    %cst_69 = arith.constant dense<0.000000e+00> : vector<1x64xf32>
    %171 = tpu.matmul %168, %170, %cst_69 {dimension_numbers = #tpu.dot_dimension_numbers<[1], [0], [0], [1], [0, 0, 1, 1], [], []>} : vector<1x8xf32>, vector<8x64xf32>, vector<1x64xf32> -> vector<1x64xf32>
    %172 = vector.extract_strided_slice %171 {offsets = [0, 0], sizes = [1, 32], strides = [1, 1]} : vector<1x64xf32> to vector<1x32xf32>
    %173 = vector.extract_strided_slice %171 {offsets = [0, 32], sizes = [1, 32], strides = [1, 1]} : vector<1x64xf32> to vector<1x32xf32>
    %174 = tpu.concatenate %165, %173 in 1 : vector<1x16xf32>, vector<1x32xf32> -> vector<1x48xf32>
    %175 = tpu.concatenate %162, %174 in 0 : vector<1x48xf32>, vector<1x48xf32> -> vector<2x48xf32>
    %176 = tpu.concatenate %160, %172 in 0 : vector<1x32xf32>, vector<1x32xf32> -> vector<2x32xf32>
    %cst_70 = arith.constant dense<0.000000e+00> : vector<2x128xf32>
    %177 = tpu.matmul %175, %2, %cst_70 {dimension_numbers = #tpu.dot_dimension_numbers<[1], [0], [0], [1], [0, 0, 1, 1], [], []>} : vector<2x48xf32>, vector<48x128xf32>, vector<2x128xf32> -> vector<2x128xf32>
    %178 = vector.broadcast %3 : vector<1x128xf32> to vector<2x128xf32>
    %179 = arith.addf %177, %178 : vector<2x128xf32>
    %180 = math.tanh %179 : vector<2x128xf32>
    %181 = arith.negf %179 : vector<2x128xf32>
    %182 = math.exp %181 : vector<2x128xf32>
    %cst_71 = arith.constant 1.000000e+00 : f32
    %183 = vector.broadcast %cst_71 : f32 to vector<2x128xf32>
    %184 = arith.addf %183, %182 : vector<2x128xf32>
    %185 = arith.divf %183, %184 : vector<2x128xf32>
    %186 = vector.shape_cast %9 : vector<1x128xi1> to vector<1x128xi1>
    %187 = vector.broadcast %186 : vector<1x128xi1> to vector<2x128xi1>
    %188 = arith.select %187, %180, %185 : vector<2x128xi1>, vector<2x128xf32>
    %189 = vector.extract_strided_slice %188 {offsets = [0, 0], sizes = [2, 32], strides = [1, 1]} : vector<2x128xf32> to vector<2x32xf32>
    %190 = vector.extract_strided_slice %188 {offsets = [0, 32], sizes = [2, 32], strides = [1, 1]} : vector<2x128xf32> to vector<2x32xf32>
    %191 = vector.extract_strided_slice %188 {offsets = [0, 64], sizes = [2, 32], strides = [1, 1]} : vector<2x128xf32> to vector<2x32xf32>
    %192 = vector.extract_strided_slice %188 {offsets = [0, 96], sizes = [2, 32], strides = [1, 1]} : vector<2x128xf32> to vector<2x32xf32>
    %193 = arith.mulf %189, %191 : vector<2x32xf32>
    %194 = arith.mulf %192, %176 : vector<2x32xf32>
    %195 = arith.addf %193, %194 : vector<2x32xf32>
    %196 = math.tanh %195 : vector<2x32xf32>
    %197 = arith.mulf %190, %196 : vector<2x32xf32>
    %198 = tpu.concatenate %195, %197 in 1 : vector<2x32xf32>, vector<2x32xf32> -> vector<2x64xf32>
    %199 = vector.extract_strided_slice %198 {offsets = [0, 0], sizes = [1, 64], strides = [1, 1]} : vector<2x64xf32> to vector<1x64xf32>
    %c0_72 = arith.constant 0 : index
    %200 = arith.index_cast %146 : i32 to index
    %c0_73 = arith.constant 0 : index
    %201 = vector.load %arg6[%c0_72, %200, %c0_73] : memref<2x8x64xf32, #tpu.memory_space<vmem>>, vector<1x1x64xf32>
    %202 = vector.shape_cast %201 : vector<1x1x64xf32> to vector<1x64xf32>
    %203 = vector.shape_cast %199 : vector<1x64xf32> to vector<1x1x64xf32>
    tpu.vector_store %arg6[%c0_72, %200, %c0_73], %203 {strides = array<i32>} : memref<2x8x64xf32, #tpu.memory_space<vmem>>, vector<1x1x64xf32>,
    %204 = vector.extract_strided_slice %198 {offsets = [1, 0], sizes = [1, 64], strides = [1, 1]} : vector<2x64xf32> to vector<1x64xf32>
    %c1_74 = arith.constant 1 : index
    %205 = arith.index_cast %150 : i32 to index
    %c0_75 = arith.constant 0 : index
    %206 = vector.load %arg6[%c1_74, %205, %c0_75] : memref<2x8x64xf32, #tpu.memory_space<vmem>>, vector<1x1x64xf32>
    %207 = vector.shape_cast %206 : vector<1x1x64xf32> to vector<1x64xf32>
    %208 = vector.shape_cast %204 : vector<1x64xf32> to vector<1x1x64xf32>
    tpu.vector_store %arg6[%c1_74, %205, %c0_75], %208 {strides = array<i32>} : memref<2x8x64xf32, #tpu.memory_space<vmem>>, vector<1x1x64xf32>,
    %c3_i32 = arith.constant 3 : i32
    %c0_i32_76 = arith.constant 0 : i32
    %209 = arith.addi %10, %c0_i32_76 : i32
    %210 = arith.addi %209, %c3_i32 : i32
    %211 = arith.index_cast %210 : i32 to index
    %212 = memref.load %arg1[%211] : memref<16xi32, #tpu.memory_space<smem>>
    %c8_i32_77 = arith.constant 8 : i32
    %213 = arith.addi %10, %c8_i32_77 : i32
    %214 = arith.addi %213, %c3_i32 : i32
    %215 = arith.index_cast %214 : i32 to index
    %216 = memref.load %arg1[%215] : memref<16xi32, #tpu.memory_space<smem>>
    %c0_78 = arith.constant 0 : index
    %217 = arith.index_cast %212 : i32 to index
    %c0_79 = arith.constant 0 : index
    %218 = vector.load %arg2[%c0_78, %217, %c0_79] : memref<2x8x16xf32, #tpu.memory_space<vmem>>, vector<1x1x16xf32>
    %219 = vector.shape_cast %218 : vector<1x1x16xf32> to vector<1x16xf32>
    %c0_80 = arith.constant 0 : index
    %220 = arith.index_cast %212 : i32 to index
    %c0_81 = arith.constant 0 : index
    %221 = vector.load %arg3[%c0_80, %220, %c0_81] : memref<2x8x8xf32, #tpu.memory_space<vmem>>, vector<1x1x8xf32>
    %222 = vector.shape_cast %221 : vector<1x1x8xf32> to vector<1x8xf32>
    %c0_82 = arith.constant 0 : index
    %c0_83 = arith.constant 0 : index
    %c0_84 = arith.constant 0 : index
    %223 = vector.load %arg6[%c0_82, %c0_83, %c0_84] : memref<2x8x64xf32, #tpu.memory_space<vmem>>, vector<1x8x64xf32>
    %224 = vector.shape_cast %223 : vector<1x8x64xf32> to vector<8x64xf32>
    %cst_85 = arith.constant dense<0.000000e+00> : vector<1x64xf32>
    %225 = tpu.matmul %222, %224, %cst_85 {dimension_numbers = #tpu.dot_dimension_numbers<[1], [0], [0], [1], [0, 0, 1, 1], [], []>} : vector<1x8xf32>, vector<8x64xf32>, vector<1x64xf32> -> vector<1x64xf32>
    %226 = vector.extract_strided_slice %225 {offsets = [0, 0], sizes = [1, 32], strides = [1, 1]} : vector<1x64xf32> to vector<1x32xf32>
    %227 = vector.extract_strided_slice %225 {offsets = [0, 32], sizes = [1, 32], strides = [1, 1]} : vector<1x64xf32> to vector<1x32xf32>
    %228 = tpu.concatenate %219, %227 in 1 : vector<1x16xf32>, vector<1x32xf32> -> vector<1x48xf32>
    %c1_86 = arith.constant 1 : index
    %229 = arith.index_cast %216 : i32 to index
    %c0_87 = arith.constant 0 : index
    %230 = vector.load %arg2[%c1_86, %229, %c0_87] : memref<2x8x16xf32, #tpu.memory_space<vmem>>, vector<1x1x16xf32>
    %231 = vector.shape_cast %230 : vector<1x1x16xf32> to vector<1x16xf32>
    %c1_88 = arith.constant 1 : index
    %232 = arith.index_cast %216 : i32 to index
    %c0_89 = arith.constant 0 : index
    %233 = vector.load %arg3[%c1_88, %232, %c0_89] : memref<2x8x8xf32, #tpu.memory_space<vmem>>, vector<1x1x8xf32>
    %234 = vector.shape_cast %233 : vector<1x1x8xf32> to vector<1x8xf32>
    %c1_90 = arith.constant 1 : index
    %c0_91 = arith.constant 0 : index
    %c0_92 = arith.constant 0 : index
    %235 = vector.load %arg6[%c1_90, %c0_91, %c0_92] : memref<2x8x64xf32, #tpu.memory_space<vmem>>, vector<1x8x64xf32>
    %236 = vector.shape_cast %235 : vector<1x8x64xf32> to vector<8x64xf32>
    %cst_93 = arith.constant dense<0.000000e+00> : vector<1x64xf32>
    %237 = tpu.matmul %234, %236, %cst_93 {dimension_numbers = #tpu.dot_dimension_numbers<[1], [0], [0], [1], [0, 0, 1, 1], [], []>} : vector<1x8xf32>, vector<8x64xf32>, vector<1x64xf32> -> vector<1x64xf32>
    %238 = vector.extract_strided_slice %237 {offsets = [0, 0], sizes = [1, 32], strides = [1, 1]} : vector<1x64xf32> to vector<1x32xf32>
    %239 = vector.extract_strided_slice %237 {offsets = [0, 32], sizes = [1, 32], strides = [1, 1]} : vector<1x64xf32> to vector<1x32xf32>
    %240 = tpu.concatenate %231, %239 in 1 : vector<1x16xf32>, vector<1x32xf32> -> vector<1x48xf32>
    %241 = tpu.concatenate %228, %240 in 0 : vector<1x48xf32>, vector<1x48xf32> -> vector<2x48xf32>
    %242 = tpu.concatenate %226, %238 in 0 : vector<1x32xf32>, vector<1x32xf32> -> vector<2x32xf32>
    %cst_94 = arith.constant dense<0.000000e+00> : vector<2x128xf32>
    %243 = tpu.matmul %241, %2, %cst_94 {dimension_numbers = #tpu.dot_dimension_numbers<[1], [0], [0], [1], [0, 0, 1, 1], [], []>} : vector<2x48xf32>, vector<48x128xf32>, vector<2x128xf32> -> vector<2x128xf32>
    %244 = vector.broadcast %3 : vector<1x128xf32> to vector<2x128xf32>
    %245 = arith.addf %243, %244 : vector<2x128xf32>
    %246 = math.tanh %245 : vector<2x128xf32>
    %247 = arith.negf %245 : vector<2x128xf32>
    %248 = math.exp %247 : vector<2x128xf32>
    %cst_95 = arith.constant 1.000000e+00 : f32
    %249 = vector.broadcast %cst_95 : f32 to vector<2x128xf32>
    %250 = arith.addf %249, %248 : vector<2x128xf32>
    %251 = arith.divf %249, %250 : vector<2x128xf32>
    %252 = vector.shape_cast %9 : vector<1x128xi1> to vector<1x128xi1>
    %253 = vector.broadcast %252 : vector<1x128xi1> to vector<2x128xi1>
    %254 = arith.select %253, %246, %251 : vector<2x128xi1>, vector<2x128xf32>
    %255 = vector.extract_strided_slice %254 {offsets = [0, 0], sizes = [2, 32], strides = [1, 1]} : vector<2x128xf32> to vector<2x32xf32>
    %256 = vector.extract_strided_slice %254 {offsets = [0, 32], sizes = [2, 32], strides = [1, 1]} : vector<2x128xf32> to vector<2x32xf32>
    %257 = vector.extract_strided_slice %254 {offsets = [0, 64], sizes = [2, 32], strides = [1, 1]} : vector<2x128xf32> to vector<2x32xf32>
    %258 = vector.extract_strided_slice %254 {offsets = [0, 96], sizes = [2, 32], strides = [1, 1]} : vector<2x128xf32> to vector<2x32xf32>
    %259 = arith.mulf %255, %257 : vector<2x32xf32>
    %260 = arith.mulf %258, %242 : vector<2x32xf32>
    %261 = arith.addf %259, %260 : vector<2x32xf32>
    %262 = math.tanh %261 : vector<2x32xf32>
    %263 = arith.mulf %256, %262 : vector<2x32xf32>
    %264 = tpu.concatenate %261, %263 in 1 : vector<2x32xf32>, vector<2x32xf32> -> vector<2x64xf32>
    %265 = vector.extract_strided_slice %264 {offsets = [0, 0], sizes = [1, 64], strides = [1, 1]} : vector<2x64xf32> to vector<1x64xf32>
    %c0_96 = arith.constant 0 : index
    %266 = arith.index_cast %212 : i32 to index
    %c0_97 = arith.constant 0 : index
    %267 = vector.load %arg6[%c0_96, %266, %c0_97] : memref<2x8x64xf32, #tpu.memory_space<vmem>>, vector<1x1x64xf32>
    %268 = vector.shape_cast %267 : vector<1x1x64xf32> to vector<1x64xf32>
    %269 = vector.shape_cast %265 : vector<1x64xf32> to vector<1x1x64xf32>
    tpu.vector_store %arg6[%c0_96, %266, %c0_97], %269 {strides = array<i32>} : memref<2x8x64xf32, #tpu.memory_space<vmem>>, vector<1x1x64xf32>,
    %270 = vector.extract_strided_slice %264 {offsets = [1, 0], sizes = [1, 64], strides = [1, 1]} : vector<2x64xf32> to vector<1x64xf32>
    %c1_98 = arith.constant 1 : index
    %271 = arith.index_cast %216 : i32 to index
    %c0_99 = arith.constant 0 : index
    %272 = vector.load %arg6[%c1_98, %271, %c0_99] : memref<2x8x64xf32, #tpu.memory_space<vmem>>, vector<1x1x64xf32>
    %273 = vector.shape_cast %272 : vector<1x1x64xf32> to vector<1x64xf32>
    %274 = vector.shape_cast %270 : vector<1x64xf32> to vector<1x1x64xf32>
    tpu.vector_store %arg6[%c1_98, %271, %c0_99], %274 {strides = array<i32>} : memref<2x8x64xf32, #tpu.memory_space<vmem>>, vector<1x1x64xf32>,
    %c4_i32 = arith.constant 4 : i32
    %c0_i32_100 = arith.constant 0 : i32
    %275 = arith.addi %10, %c0_i32_100 : i32
    %276 = arith.addi %275, %c4_i32 : i32
    %277 = arith.index_cast %276 : i32 to index
    %278 = memref.load %arg1[%277] : memref<16xi32, #tpu.memory_space<smem>>
    %c8_i32_101 = arith.constant 8 : i32
    %279 = arith.addi %10, %c8_i32_101 : i32
    %280 = arith.addi %279, %c4_i32 : i32
    %281 = arith.index_cast %280 : i32 to index
    %282 = memref.load %arg1[%281] : memref<16xi32, #tpu.memory_space<smem>>
    %c0_102 = arith.constant 0 : index
    %283 = arith.index_cast %278 : i32 to index
    %c0_103 = arith.constant 0 : index
    %284 = vector.load %arg2[%c0_102, %283, %c0_103] : memref<2x8x16xf32, #tpu.memory_space<vmem>>, vector<1x1x16xf32>
    %285 = vector.shape_cast %284 : vector<1x1x16xf32> to vector<1x16xf32>
    %c0_104 = arith.constant 0 : index
    %286 = arith.index_cast %278 : i32 to index
    %c0_105 = arith.constant 0 : index
    %287 = vector.load %arg3[%c0_104, %286, %c0_105] : memref<2x8x8xf32, #tpu.memory_space<vmem>>, vector<1x1x8xf32>
    %288 = vector.shape_cast %287 : vector<1x1x8xf32> to vector<1x8xf32>
    %c0_106 = arith.constant 0 : index
    %c0_107 = arith.constant 0 : index
    %c0_108 = arith.constant 0 : index
    %289 = vector.load %arg6[%c0_106, %c0_107, %c0_108] : memref<2x8x64xf32, #tpu.memory_space<vmem>>, vector<1x8x64xf32>
    %290 = vector.shape_cast %289 : vector<1x8x64xf32> to vector<8x64xf32>
    %cst_109 = arith.constant dense<0.000000e+00> : vector<1x64xf32>
    %291 = tpu.matmul %288, %290, %cst_109 {dimension_numbers = #tpu.dot_dimension_numbers<[1], [0], [0], [1], [0, 0, 1, 1], [], []>} : vector<1x8xf32>, vector<8x64xf32>, vector<1x64xf32> -> vector<1x64xf32>
    %292 = vector.extract_strided_slice %291 {offsets = [0, 0], sizes = [1, 32], strides = [1, 1]} : vector<1x64xf32> to vector<1x32xf32>
    %293 = vector.extract_strided_slice %291 {offsets = [0, 32], sizes = [1, 32], strides = [1, 1]} : vector<1x64xf32> to vector<1x32xf32>
    %294 = tpu.concatenate %285, %293 in 1 : vector<1x16xf32>, vector<1x32xf32> -> vector<1x48xf32>
    %c1_110 = arith.constant 1 : index
    %295 = arith.index_cast %282 : i32 to index
    %c0_111 = arith.constant 0 : index
    %296 = vector.load %arg2[%c1_110, %295, %c0_111] : memref<2x8x16xf32, #tpu.memory_space<vmem>>, vector<1x1x16xf32>
    %297 = vector.shape_cast %296 : vector<1x1x16xf32> to vector<1x16xf32>
    %c1_112 = arith.constant 1 : index
    %298 = arith.index_cast %282 : i32 to index
    %c0_113 = arith.constant 0 : index
    %299 = vector.load %arg3[%c1_112, %298, %c0_113] : memref<2x8x8xf32, #tpu.memory_space<vmem>>, vector<1x1x8xf32>
    %300 = vector.shape_cast %299 : vector<1x1x8xf32> to vector<1x8xf32>
    %c1_114 = arith.constant 1 : index
    %c0_115 = arith.constant 0 : index
    %c0_116 = arith.constant 0 : index
    %301 = vector.load %arg6[%c1_114, %c0_115, %c0_116] : memref<2x8x64xf32, #tpu.memory_space<vmem>>, vector<1x8x64xf32>
    %302 = vector.shape_cast %301 : vector<1x8x64xf32> to vector<8x64xf32>
    %cst_117 = arith.constant dense<0.000000e+00> : vector<1x64xf32>
    %303 = tpu.matmul %300, %302, %cst_117 {dimension_numbers = #tpu.dot_dimension_numbers<[1], [0], [0], [1], [0, 0, 1, 1], [], []>} : vector<1x8xf32>, vector<8x64xf32>, vector<1x64xf32> -> vector<1x64xf32>
    %304 = vector.extract_strided_slice %303 {offsets = [0, 0], sizes = [1, 32], strides = [1, 1]} : vector<1x64xf32> to vector<1x32xf32>
    %305 = vector.extract_strided_slice %303 {offsets = [0, 32], sizes = [1, 32], strides = [1, 1]} : vector<1x64xf32> to vector<1x32xf32>
    %306 = tpu.concatenate %297, %305 in 1 : vector<1x16xf32>, vector<1x32xf32> -> vector<1x48xf32>
    %307 = tpu.concatenate %294, %306 in 0 : vector<1x48xf32>, vector<1x48xf32> -> vector<2x48xf32>
    %308 = tpu.concatenate %292, %304 in 0 : vector<1x32xf32>, vector<1x32xf32> -> vector<2x32xf32>
    %cst_118 = arith.constant dense<0.000000e+00> : vector<2x128xf32>
    %309 = tpu.matmul %307, %2, %cst_118 {dimension_numbers = #tpu.dot_dimension_numbers<[1], [0], [0], [1], [0, 0, 1, 1], [], []>} : vector<2x48xf32>, vector<48x128xf32>, vector<2x128xf32> -> vector<2x128xf32>
    %310 = vector.broadcast %3 : vector<1x128xf32> to vector<2x128xf32>
    %311 = arith.addf %309, %310 : vector<2x128xf32>
    %312 = math.tanh %311 : vector<2x128xf32>
    %313 = arith.negf %311 : vector<2x128xf32>
    %314 = math.exp %313 : vector<2x128xf32>
    %cst_119 = arith.constant 1.000000e+00 : f32
    %315 = vector.broadcast %cst_119 : f32 to vector<2x128xf32>
    %316 = arith.addf %315, %314 : vector<2x128xf32>
    %317 = arith.divf %315, %316 : vector<2x128xf32>
    %318 = vector.shape_cast %9 : vector<1x128xi1> to vector<1x128xi1>
    %319 = vector.broadcast %318 : vector<1x128xi1> to vector<2x128xi1>
    %320 = arith.select %319, %312, %317 : vector<2x128xi1>, vector<2x128xf32>
    %321 = vector.extract_strided_slice %320 {offsets = [0, 0], sizes = [2, 32], strides = [1, 1]} : vector<2x128xf32> to vector<2x32xf32>
    %322 = vector.extract_strided_slice %320 {offsets = [0, 32], sizes = [2, 32], strides = [1, 1]} : vector<2x128xf32> to vector<2x32xf32>
    %323 = vector.extract_strided_slice %320 {offsets = [0, 64], sizes = [2, 32], strides = [1, 1]} : vector<2x128xf32> to vector<2x32xf32>
    %324 = vector.extract_strided_slice %320 {offsets = [0, 96], sizes = [2, 32], strides = [1, 1]} : vector<2x128xf32> to vector<2x32xf32>
    %325 = arith.mulf %321, %323 : vector<2x32xf32>
    %326 = arith.mulf %324, %308 : vector<2x32xf32>
    %327 = arith.addf %325, %326 : vector<2x32xf32>
    %328 = math.tanh %327 : vector<2x32xf32>
    %329 = arith.mulf %322, %328 : vector<2x32xf32>
    %330 = tpu.concatenate %327, %329 in 1 : vector<2x32xf32>, vector<2x32xf32> -> vector<2x64xf32>
    %331 = vector.extract_strided_slice %330 {offsets = [0, 0], sizes = [1, 64], strides = [1, 1]} : vector<2x64xf32> to vector<1x64xf32>
    %c0_120 = arith.constant 0 : index
    %332 = arith.index_cast %278 : i32 to index
    %c0_121 = arith.constant 0 : index
    %333 = vector.load %arg6[%c0_120, %332, %c0_121] : memref<2x8x64xf32, #tpu.memory_space<vmem>>, vector<1x1x64xf32>
    %334 = vector.shape_cast %333 : vector<1x1x64xf32> to vector<1x64xf32>
    %335 = vector.shape_cast %331 : vector<1x64xf32> to vector<1x1x64xf32>
    tpu.vector_store %arg6[%c0_120, %332, %c0_121], %335 {strides = array<i32>} : memref<2x8x64xf32, #tpu.memory_space<vmem>>, vector<1x1x64xf32>,
    %336 = vector.extract_strided_slice %330 {offsets = [1, 0], sizes = [1, 64], strides = [1, 1]} : vector<2x64xf32> to vector<1x64xf32>
    %c1_122 = arith.constant 1 : index
    %337 = arith.index_cast %282 : i32 to index
    %c0_123 = arith.constant 0 : index
    %338 = vector.load %arg6[%c1_122, %337, %c0_123] : memref<2x8x64xf32, #tpu.memory_space<vmem>>, vector<1x1x64xf32>
    %339 = vector.shape_cast %338 : vector<1x1x64xf32> to vector<1x64xf32>
    %340 = vector.shape_cast %336 : vector<1x64xf32> to vector<1x1x64xf32>
    tpu.vector_store %arg6[%c1_122, %337, %c0_123], %340 {strides = array<i32>} : memref<2x8x64xf32, #tpu.memory_space<vmem>>, vector<1x1x64xf32>,
    %c5_i32 = arith.constant 5 : i32
    %c0_i32_124 = arith.constant 0 : i32
    %341 = arith.addi %10, %c0_i32_124 : i32
    %342 = arith.addi %341, %c5_i32 : i32
    %343 = arith.index_cast %342 : i32 to index
    %344 = memref.load %arg1[%343] : memref<16xi32, #tpu.memory_space<smem>>
    %c8_i32_125 = arith.constant 8 : i32
    %345 = arith.addi %10, %c8_i32_125 : i32
    %346 = arith.addi %345, %c5_i32 : i32
    %347 = arith.index_cast %346 : i32 to index
    %348 = memref.load %arg1[%347] : memref<16xi32, #tpu.memory_space<smem>>
    %c0_126 = arith.constant 0 : index
    %349 = arith.index_cast %344 : i32 to index
    %c0_127 = arith.constant 0 : index
    %350 = vector.load %arg2[%c0_126, %349, %c0_127] : memref<2x8x16xf32, #tpu.memory_space<vmem>>, vector<1x1x16xf32>
    %351 = vector.shape_cast %350 : vector<1x1x16xf32> to vector<1x16xf32>
    %c0_128 = arith.constant 0 : index
    %352 = arith.index_cast %344 : i32 to index
    %c0_129 = arith.constant 0 : index
    %353 = vector.load %arg3[%c0_128, %352, %c0_129] : memref<2x8x8xf32, #tpu.memory_space<vmem>>, vector<1x1x8xf32>
    %354 = vector.shape_cast %353 : vector<1x1x8xf32> to vector<1x8xf32>
    %c0_130 = arith.constant 0 : index
    %c0_131 = arith.constant 0 : index
    %c0_132 = arith.constant 0 : index
    %355 = vector.load %arg6[%c0_130, %c0_131, %c0_132] : memref<2x8x64xf32, #tpu.memory_space<vmem>>, vector<1x8x64xf32>
    %356 = vector.shape_cast %355 : vector<1x8x64xf32> to vector<8x64xf32>
    %cst_133 = arith.constant dense<0.000000e+00> : vector<1x64xf32>
    %357 = tpu.matmul %354, %356, %cst_133 {dimension_numbers = #tpu.dot_dimension_numbers<[1], [0], [0], [1], [0, 0, 1, 1], [], []>} : vector<1x8xf32>, vector<8x64xf32>, vector<1x64xf32> -> vector<1x64xf32>
    %358 = vector.extract_strided_slice %357 {offsets = [0, 0], sizes = [1, 32], strides = [1, 1]} : vector<1x64xf32> to vector<1x32xf32>
    %359 = vector.extract_strided_slice %357 {offsets = [0, 32], sizes = [1, 32], strides = [1, 1]} : vector<1x64xf32> to vector<1x32xf32>
    %360 = tpu.concatenate %351, %359 in 1 : vector<1x16xf32>, vector<1x32xf32> -> vector<1x48xf32>
    %c1_134 = arith.constant 1 : index
    %361 = arith.index_cast %348 : i32 to index
    %c0_135 = arith.constant 0 : index
    %362 = vector.load %arg2[%c1_134, %361, %c0_135] : memref<2x8x16xf32, #tpu.memory_space<vmem>>, vector<1x1x16xf32>
    %363 = vector.shape_cast %362 : vector<1x1x16xf32> to vector<1x16xf32>
    %c1_136 = arith.constant 1 : index
    %364 = arith.index_cast %348 : i32 to index
    %c0_137 = arith.constant 0 : index
    %365 = vector.load %arg3[%c1_136, %364, %c0_137] : memref<2x8x8xf32, #tpu.memory_space<vmem>>, vector<1x1x8xf32>
    %366 = vector.shape_cast %365 : vector<1x1x8xf32> to vector<1x8xf32>
    %c1_138 = arith.constant 1 : index
    %c0_139 = arith.constant 0 : index
    %c0_140 = arith.constant 0 : index
    %367 = vector.load %arg6[%c1_138, %c0_139, %c0_140] : memref<2x8x64xf32, #tpu.memory_space<vmem>>, vector<1x8x64xf32>
    %368 = vector.shape_cast %367 : vector<1x8x64xf32> to vector<8x64xf32>
    %cst_141 = arith.constant dense<0.000000e+00> : vector<1x64xf32>
    %369 = tpu.matmul %366, %368, %cst_141 {dimension_numbers = #tpu.dot_dimension_numbers<[1], [0], [0], [1], [0, 0, 1, 1], [], []>} : vector<1x8xf32>, vector<8x64xf32>, vector<1x64xf32> -> vector<1x64xf32>
    %370 = vector.extract_strided_slice %369 {offsets = [0, 0], sizes = [1, 32], strides = [1, 1]} : vector<1x64xf32> to vector<1x32xf32>
    %371 = vector.extract_strided_slice %369 {offsets = [0, 32], sizes = [1, 32], strides = [1, 1]} : vector<1x64xf32> to vector<1x32xf32>
    %372 = tpu.concatenate %363, %371 in 1 : vector<1x16xf32>, vector<1x32xf32> -> vector<1x48xf32>
    %373 = tpu.concatenate %360, %372 in 0 : vector<1x48xf32>, vector<1x48xf32> -> vector<2x48xf32>
    %374 = tpu.concatenate %358, %370 in 0 : vector<1x32xf32>, vector<1x32xf32> -> vector<2x32xf32>
    %cst_142 = arith.constant dense<0.000000e+00> : vector<2x128xf32>
    %375 = tpu.matmul %373, %2, %cst_142 {dimension_numbers = #tpu.dot_dimension_numbers<[1], [0], [0], [1], [0, 0, 1, 1], [], []>} : vector<2x48xf32>, vector<48x128xf32>, vector<2x128xf32> -> vector<2x128xf32>
    %376 = vector.broadcast %3 : vector<1x128xf32> to vector<2x128xf32>
    %377 = arith.addf %375, %376 : vector<2x128xf32>
    %378 = math.tanh %377 : vector<2x128xf32>
    %379 = arith.negf %377 : vector<2x128xf32>
    %380 = math.exp %379 : vector<2x128xf32>
    %cst_143 = arith.constant 1.000000e+00 : f32
    %381 = vector.broadcast %cst_143 : f32 to vector<2x128xf32>
    %382 = arith.addf %381, %380 : vector<2x128xf32>
    %383 = arith.divf %381, %382 : vector<2x128xf32>
    %384 = vector.shape_cast %9 : vector<1x128xi1> to vector<1x128xi1>
    %385 = vector.broadcast %384 : vector<1x128xi1> to vector<2x128xi1>
    %386 = arith.select %385, %378, %383 : vector<2x128xi1>, vector<2x128xf32>
    %387 = vector.extract_strided_slice %386 {offsets = [0, 0], sizes = [2, 32], strides = [1, 1]} : vector<2x128xf32> to vector<2x32xf32>
    %388 = vector.extract_strided_slice %386 {offsets = [0, 32], sizes = [2, 32], strides = [1, 1]} : vector<2x128xf32> to vector<2x32xf32>
    %389 = vector.extract_strided_slice %386 {offsets = [0, 64], sizes = [2, 32], strides = [1, 1]} : vector<2x128xf32> to vector<2x32xf32>
    %390 = vector.extract_strided_slice %386 {offsets = [0, 96], sizes = [2, 32], strides = [1, 1]} : vector<2x128xf32> to vector<2x32xf32>
    %391 = arith.mulf %387, %389 : vector<2x32xf32>
    %392 = arith.mulf %390, %374 : vector<2x32xf32>
    %393 = arith.addf %391, %392 : vector<2x32xf32>
    %394 = math.tanh %393 : vector<2x32xf32>
    %395 = arith.mulf %388, %394 : vector<2x32xf32>
    %396 = tpu.concatenate %393, %395 in 1 : vector<2x32xf32>, vector<2x32xf32> -> vector<2x64xf32>
    %397 = vector.extract_strided_slice %396 {offsets = [0, 0], sizes = [1, 64], strides = [1, 1]} : vector<2x64xf32> to vector<1x64xf32>
    %c0_144 = arith.constant 0 : index
    %398 = arith.index_cast %344 : i32 to index
    %c0_145 = arith.constant 0 : index
    %399 = vector.load %arg6[%c0_144, %398, %c0_145] : memref<2x8x64xf32, #tpu.memory_space<vmem>>, vector<1x1x64xf32>
    %400 = vector.shape_cast %399 : vector<1x1x64xf32> to vector<1x64xf32>
    %401 = vector.shape_cast %397 : vector<1x64xf32> to vector<1x1x64xf32>
    tpu.vector_store %arg6[%c0_144, %398, %c0_145], %401 {strides = array<i32>} : memref<2x8x64xf32, #tpu.memory_space<vmem>>, vector<1x1x64xf32>,
    %402 = vector.extract_strided_slice %396 {offsets = [1, 0], sizes = [1, 64], strides = [1, 1]} : vector<2x64xf32> to vector<1x64xf32>
    %c1_146 = arith.constant 1 : index
    %403 = arith.index_cast %348 : i32 to index
    %c0_147 = arith.constant 0 : index
    %404 = vector.load %arg6[%c1_146, %403, %c0_147] : memref<2x8x64xf32, #tpu.memory_space<vmem>>, vector<1x1x64xf32>
    %405 = vector.shape_cast %404 : vector<1x1x64xf32> to vector<1x64xf32>
    %406 = vector.shape_cast %402 : vector<1x64xf32> to vector<1x1x64xf32>
    tpu.vector_store %arg6[%c1_146, %403, %c0_147], %406 {strides = array<i32>} : memref<2x8x64xf32, #tpu.memory_space<vmem>>, vector<1x1x64xf32>,
    %c6_i32 = arith.constant 6 : i32
    %c0_i32_148 = arith.constant 0 : i32
    %407 = arith.addi %10, %c0_i32_148 : i32
    %408 = arith.addi %407, %c6_i32 : i32
    %409 = arith.index_cast %408 : i32 to index
    %410 = memref.load %arg1[%409] : memref<16xi32, #tpu.memory_space<smem>>
    %c8_i32_149 = arith.constant 8 : i32
    %411 = arith.addi %10, %c8_i32_149 : i32
    %412 = arith.addi %411, %c6_i32 : i32
    %413 = arith.index_cast %412 : i32 to index
    %414 = memref.load %arg1[%413] : memref<16xi32, #tpu.memory_space<smem>>
    %c0_150 = arith.constant 0 : index
    %415 = arith.index_cast %410 : i32 to index
    %c0_151 = arith.constant 0 : index
    %416 = vector.load %arg2[%c0_150, %415, %c0_151] : memref<2x8x16xf32, #tpu.memory_space<vmem>>, vector<1x1x16xf32>
    %417 = vector.shape_cast %416 : vector<1x1x16xf32> to vector<1x16xf32>
    %c0_152 = arith.constant 0 : index
    %418 = arith.index_cast %410 : i32 to index
    %c0_153 = arith.constant 0 : index
    %419 = vector.load %arg3[%c0_152, %418, %c0_153] : memref<2x8x8xf32, #tpu.memory_space<vmem>>, vector<1x1x8xf32>
    %420 = vector.shape_cast %419 : vector<1x1x8xf32> to vector<1x8xf32>
    %c0_154 = arith.constant 0 : index
    %c0_155 = arith.constant 0 : index
    %c0_156 = arith.constant 0 : index
    %421 = vector.load %arg6[%c0_154, %c0_155, %c0_156] : memref<2x8x64xf32, #tpu.memory_space<vmem>>, vector<1x8x64xf32>
    %422 = vector.shape_cast %421 : vector<1x8x64xf32> to vector<8x64xf32>
    %cst_157 = arith.constant dense<0.000000e+00> : vector<1x64xf32>
    %423 = tpu.matmul %420, %422, %cst_157 {dimension_numbers = #tpu.dot_dimension_numbers<[1], [0], [0], [1], [0, 0, 1, 1], [], []>} : vector<1x8xf32>, vector<8x64xf32>, vector<1x64xf32> -> vector<1x64xf32>
    %424 = vector.extract_strided_slice %423 {offsets = [0, 0], sizes = [1, 32], strides = [1, 1]} : vector<1x64xf32> to vector<1x32xf32>
    %425 = vector.extract_strided_slice %423 {offsets = [0, 32], sizes = [1, 32], strides = [1, 1]} : vector<1x64xf32> to vector<1x32xf32>
    %426 = tpu.concatenate %417, %425 in 1 : vector<1x16xf32>, vector<1x32xf32> -> vector<1x48xf32>
    %c1_158 = arith.constant 1 : index
    %427 = arith.index_cast %414 : i32 to index
    %c0_159 = arith.constant 0 : index
    %428 = vector.load %arg2[%c1_158, %427, %c0_159] : memref<2x8x16xf32, #tpu.memory_space<vmem>>, vector<1x1x16xf32>
    %429 = vector.shape_cast %428 : vector<1x1x16xf32> to vector<1x16xf32>
    %c1_160 = arith.constant 1 : index
    %430 = arith.index_cast %414 : i32 to index
    %c0_161 = arith.constant 0 : index
    %431 = vector.load %arg3[%c1_160, %430, %c0_161] : memref<2x8x8xf32, #tpu.memory_space<vmem>>, vector<1x1x8xf32>
    %432 = vector.shape_cast %431 : vector<1x1x8xf32> to vector<1x8xf32>
    %c1_162 = arith.constant 1 : index
    %c0_163 = arith.constant 0 : index
    %c0_164 = arith.constant 0 : index
    %433 = vector.load %arg6[%c1_162, %c0_163, %c0_164] : memref<2x8x64xf32, #tpu.memory_space<vmem>>, vector<1x8x64xf32>
    %434 = vector.shape_cast %433 : vector<1x8x64xf32> to vector<8x64xf32>
    %cst_165 = arith.constant dense<0.000000e+00> : vector<1x64xf32>
    %435 = tpu.matmul %432, %434, %cst_165 {dimension_numbers = #tpu.dot_dimension_numbers<[1], [0], [0], [1], [0, 0, 1, 1], [], []>} : vector<1x8xf32>, vector<8x64xf32>, vector<1x64xf32> -> vector<1x64xf32>
    %436 = vector.extract_strided_slice %435 {offsets = [0, 0], sizes = [1, 32], strides = [1, 1]} : vector<1x64xf32> to vector<1x32xf32>
    %437 = vector.extract_strided_slice %435 {offsets = [0, 32], sizes = [1, 32], strides = [1, 1]} : vector<1x64xf32> to vector<1x32xf32>
    %438 = tpu.concatenate %429, %437 in 1 : vector<1x16xf32>, vector<1x32xf32> -> vector<1x48xf32>
    %439 = tpu.concatenate %426, %438 in 0 : vector<1x48xf32>, vector<1x48xf32> -> vector<2x48xf32>
    %440 = tpu.concatenate %424, %436 in 0 : vector<1x32xf32>, vector<1x32xf32> -> vector<2x32xf32>
    %cst_166 = arith.constant dense<0.000000e+00> : vector<2x128xf32>
    %441 = tpu.matmul %439, %2, %cst_166 {dimension_numbers = #tpu.dot_dimension_numbers<[1], [0], [0], [1], [0, 0, 1, 1], [], []>} : vector<2x48xf32>, vector<48x128xf32>, vector<2x128xf32> -> vector<2x128xf32>
    %442 = vector.broadcast %3 : vector<1x128xf32> to vector<2x128xf32>
    %443 = arith.addf %441, %442 : vector<2x128xf32>
    %444 = math.tanh %443 : vector<2x128xf32>
    %445 = arith.negf %443 : vector<2x128xf32>
    %446 = math.exp %445 : vector<2x128xf32>
    %cst_167 = arith.constant 1.000000e+00 : f32
    %447 = vector.broadcast %cst_167 : f32 to vector<2x128xf32>
    %448 = arith.addf %447, %446 : vector<2x128xf32>
    %449 = arith.divf %447, %448 : vector<2x128xf32>
    %450 = vector.shape_cast %9 : vector<1x128xi1> to vector<1x128xi1>
    %451 = vector.broadcast %450 : vector<1x128xi1> to vector<2x128xi1>
    %452 = arith.select %451, %444, %449 : vector<2x128xi1>, vector<2x128xf32>
    %453 = vector.extract_strided_slice %452 {offsets = [0, 0], sizes = [2, 32], strides = [1, 1]} : vector<2x128xf32> to vector<2x32xf32>
    %454 = vector.extract_strided_slice %452 {offsets = [0, 32], sizes = [2, 32], strides = [1, 1]} : vector<2x128xf32> to vector<2x32xf32>
    %455 = vector.extract_strided_slice %452 {offsets = [0, 64], sizes = [2, 32], strides = [1, 1]} : vector<2x128xf32> to vector<2x32xf32>
    %456 = vector.extract_strided_slice %452 {offsets = [0, 96], sizes = [2, 32], strides = [1, 1]} : vector<2x128xf32> to vector<2x32xf32>
    %457 = arith.mulf %453, %455 : vector<2x32xf32>
    %458 = arith.mulf %456, %440 : vector<2x32xf32>
    %459 = arith.addf %457, %458 : vector<2x32xf32>
    %460 = math.tanh %459 : vector<2x32xf32>
    %461 = arith.mulf %454, %460 : vector<2x32xf32>
    %462 = tpu.concatenate %459, %461 in 1 : vector<2x32xf32>, vector<2x32xf32> -> vector<2x64xf32>
    %463 = vector.extract_strided_slice %462 {offsets = [0, 0], sizes = [1, 64], strides = [1, 1]} : vector<2x64xf32> to vector<1x64xf32>
    %c0_168 = arith.constant 0 : index
    %464 = arith.index_cast %410 : i32 to index
    %c0_169 = arith.constant 0 : index
    %465 = vector.load %arg6[%c0_168, %464, %c0_169] : memref<2x8x64xf32, #tpu.memory_space<vmem>>, vector<1x1x64xf32>
    %466 = vector.shape_cast %465 : vector<1x1x64xf32> to vector<1x64xf32>
    %467 = vector.shape_cast %463 : vector<1x64xf32> to vector<1x1x64xf32>
    tpu.vector_store %arg6[%c0_168, %464, %c0_169], %467 {strides = array<i32>} : memref<2x8x64xf32, #tpu.memory_space<vmem>>, vector<1x1x64xf32>,
    %468 = vector.extract_strided_slice %462 {offsets = [1, 0], sizes = [1, 64], strides = [1, 1]} : vector<2x64xf32> to vector<1x64xf32>
    %c1_170 = arith.constant 1 : index
    %469 = arith.index_cast %414 : i32 to index
    %c0_171 = arith.constant 0 : index
    %470 = vector.load %arg6[%c1_170, %469, %c0_171] : memref<2x8x64xf32, #tpu.memory_space<vmem>>, vector<1x1x64xf32>
    %471 = vector.shape_cast %470 : vector<1x1x64xf32> to vector<1x64xf32>
    %472 = vector.shape_cast %468 : vector<1x64xf32> to vector<1x1x64xf32>
    tpu.vector_store %arg6[%c1_170, %469, %c0_171], %472 {strides = array<i32>} : memref<2x8x64xf32, #tpu.memory_space<vmem>>, vector<1x1x64xf32>,
    %c7_i32 = arith.constant 7 : i32
    %c0_i32_172 = arith.constant 0 : i32
    %473 = arith.addi %10, %c0_i32_172 : i32
    %474 = arith.addi %473, %c7_i32 : i32
    %475 = arith.index_cast %474 : i32 to index
    %476 = memref.load %arg1[%475] : memref<16xi32, #tpu.memory_space<smem>>
    %c8_i32_173 = arith.constant 8 : i32
    %477 = arith.addi %10, %c8_i32_173 : i32
    %478 = arith.addi %477, %c7_i32 : i32
    %479 = arith.index_cast %478 : i32 to index
    %480 = memref.load %arg1[%479] : memref<16xi32, #tpu.memory_space<smem>>
    %c0_174 = arith.constant 0 : index
    %481 = arith.index_cast %476 : i32 to index
    %c0_175 = arith.constant 0 : index
    %482 = vector.load %arg2[%c0_174, %481, %c0_175] : memref<2x8x16xf32, #tpu.memory_space<vmem>>, vector<1x1x16xf32>
    %483 = vector.shape_cast %482 : vector<1x1x16xf32> to vector<1x16xf32>
    %c0_176 = arith.constant 0 : index
    %484 = arith.index_cast %476 : i32 to index
    %c0_177 = arith.constant 0 : index
    %485 = vector.load %arg3[%c0_176, %484, %c0_177] : memref<2x8x8xf32, #tpu.memory_space<vmem>>, vector<1x1x8xf32>
    %486 = vector.shape_cast %485 : vector<1x1x8xf32> to vector<1x8xf32>
    %c0_178 = arith.constant 0 : index
    %c0_179 = arith.constant 0 : index
    %c0_180 = arith.constant 0 : index
    %487 = vector.load %arg6[%c0_178, %c0_179, %c0_180] : memref<2x8x64xf32, #tpu.memory_space<vmem>>, vector<1x8x64xf32>
    %488 = vector.shape_cast %487 : vector<1x8x64xf32> to vector<8x64xf32>
    %cst_181 = arith.constant dense<0.000000e+00> : vector<1x64xf32>
    %489 = tpu.matmul %486, %488, %cst_181 {dimension_numbers = #tpu.dot_dimension_numbers<[1], [0], [0], [1], [0, 0, 1, 1], [], []>} : vector<1x8xf32>, vector<8x64xf32>, vector<1x64xf32> -> vector<1x64xf32>
    %490 = vector.extract_strided_slice %489 {offsets = [0, 0], sizes = [1, 32], strides = [1, 1]} : vector<1x64xf32> to vector<1x32xf32>
    %491 = vector.extract_strided_slice %489 {offsets = [0, 32], sizes = [1, 32], strides = [1, 1]} : vector<1x64xf32> to vector<1x32xf32>
    %492 = tpu.concatenate %483, %491 in 1 : vector<1x16xf32>, vector<1x32xf32> -> vector<1x48xf32>
    %c1_182 = arith.constant 1 : index
    %493 = arith.index_cast %480 : i32 to index
    %c0_183 = arith.constant 0 : index
    %494 = vector.load %arg2[%c1_182, %493, %c0_183] : memref<2x8x16xf32, #tpu.memory_space<vmem>>, vector<1x1x16xf32>
    %495 = vector.shape_cast %494 : vector<1x1x16xf32> to vector<1x16xf32>
    %c1_184 = arith.constant 1 : index
    %496 = arith.index_cast %480 : i32 to index
    %c0_185 = arith.constant 0 : index
    %497 = vector.load %arg3[%c1_184, %496, %c0_185] : memref<2x8x8xf32, #tpu.memory_space<vmem>>, vector<1x1x8xf32>
    %498 = vector.shape_cast %497 : vector<1x1x8xf32> to vector<1x8xf32>
    %c1_186 = arith.constant 1 : index
    %c0_187 = arith.constant 0 : index
    %c0_188 = arith.constant 0 : index
    %499 = vector.load %arg6[%c1_186, %c0_187, %c0_188] : memref<2x8x64xf32, #tpu.memory_space<vmem>>, vector<1x8x64xf32>
    %500 = vector.shape_cast %499 : vector<1x8x64xf32> to vector<8x64xf32>
    %cst_189 = arith.constant dense<0.000000e+00> : vector<1x64xf32>
    %501 = tpu.matmul %498, %500, %cst_189 {dimension_numbers = #tpu.dot_dimension_numbers<[1], [0], [0], [1], [0, 0, 1, 1], [], []>} : vector<1x8xf32>, vector<8x64xf32>, vector<1x64xf32> -> vector<1x64xf32>
    %502 = vector.extract_strided_slice %501 {offsets = [0, 0], sizes = [1, 32], strides = [1, 1]} : vector<1x64xf32> to vector<1x32xf32>
    %503 = vector.extract_strided_slice %501 {offsets = [0, 32], sizes = [1, 32], strides = [1, 1]} : vector<1x64xf32> to vector<1x32xf32>
    %504 = tpu.concatenate %495, %503 in 1 : vector<1x16xf32>, vector<1x32xf32> -> vector<1x48xf32>
    %505 = tpu.concatenate %492, %504 in 0 : vector<1x48xf32>, vector<1x48xf32> -> vector<2x48xf32>
    %506 = tpu.concatenate %490, %502 in 0 : vector<1x32xf32>, vector<1x32xf32> -> vector<2x32xf32>
    %cst_190 = arith.constant dense<0.000000e+00> : vector<2x128xf32>
    %507 = tpu.matmul %505, %2, %cst_190 {dimension_numbers = #tpu.dot_dimension_numbers<[1], [0], [0], [1], [0, 0, 1, 1], [], []>} : vector<2x48xf32>, vector<48x128xf32>, vector<2x128xf32> -> vector<2x128xf32>
    %508 = vector.broadcast %3 : vector<1x128xf32> to vector<2x128xf32>
    %509 = arith.addf %507, %508 : vector<2x128xf32>
    %510 = math.tanh %509 : vector<2x128xf32>
    %511 = arith.negf %509 : vector<2x128xf32>
    %512 = math.exp %511 : vector<2x128xf32>
    %cst_191 = arith.constant 1.000000e+00 : f32
    %513 = vector.broadcast %cst_191 : f32 to vector<2x128xf32>
    %514 = arith.addf %513, %512 : vector<2x128xf32>
    %515 = arith.divf %513, %514 : vector<2x128xf32>
    %516 = vector.shape_cast %9 : vector<1x128xi1> to vector<1x128xi1>
    %517 = vector.broadcast %516 : vector<1x128xi1> to vector<2x128xi1>
    %518 = arith.select %517, %510, %515 : vector<2x128xi1>, vector<2x128xf32>
    %519 = vector.extract_strided_slice %518 {offsets = [0, 0], sizes = [2, 32], strides = [1, 1]} : vector<2x128xf32> to vector<2x32xf32>
    %520 = vector.extract_strided_slice %518 {offsets = [0, 32], sizes = [2, 32], strides = [1, 1]} : vector<2x128xf32> to vector<2x32xf32>
    %521 = vector.extract_strided_slice %518 {offsets = [0, 64], sizes = [2, 32], strides = [1, 1]} : vector<2x128xf32> to vector<2x32xf32>
    %522 = vector.extract_strided_slice %518 {offsets = [0, 96], sizes = [2, 32], strides = [1, 1]} : vector<2x128xf32> to vector<2x32xf32>
    %523 = arith.mulf %519, %521 : vector<2x32xf32>
    %524 = arith.mulf %522, %506 : vector<2x32xf32>
    %525 = arith.addf %523, %524 : vector<2x32xf32>
    %526 = math.tanh %525 : vector<2x32xf32>
    %527 = arith.mulf %520, %526 : vector<2x32xf32>
    %528 = tpu.concatenate %525, %527 in 1 : vector<2x32xf32>, vector<2x32xf32> -> vector<2x64xf32>
    %529 = vector.extract_strided_slice %528 {offsets = [0, 0], sizes = [1, 64], strides = [1, 1]} : vector<2x64xf32> to vector<1x64xf32>
    %c0_192 = arith.constant 0 : index
    %530 = arith.index_cast %476 : i32 to index
    %c0_193 = arith.constant 0 : index
    %531 = vector.load %arg6[%c0_192, %530, %c0_193] : memref<2x8x64xf32, #tpu.memory_space<vmem>>, vector<1x1x64xf32>
    %532 = vector.shape_cast %531 : vector<1x1x64xf32> to vector<1x64xf32>
    %533 = vector.shape_cast %529 : vector<1x64xf32> to vector<1x1x64xf32>
    tpu.vector_store %arg6[%c0_192, %530, %c0_193], %533 {strides = array<i32>} : memref<2x8x64xf32, #tpu.memory_space<vmem>>, vector<1x1x64xf32>,
    %534 = vector.extract_strided_slice %528 {offsets = [1, 0], sizes = [1, 64], strides = [1, 1]} : vector<2x64xf32> to vector<1x64xf32>
    %c1_194 = arith.constant 1 : index
    %535 = arith.index_cast %480 : i32 to index
    %c0_195 = arith.constant 0 : index
    %536 = vector.load %arg6[%c1_194, %535, %c0_195] : memref<2x8x64xf32, #tpu.memory_space<vmem>>, vector<1x1x64xf32>
    %537 = vector.shape_cast %536 : vector<1x1x64xf32> to vector<1x64xf32>
    %538 = vector.shape_cast %534 : vector<1x64xf32> to vector<1x1x64xf32>
    tpu.vector_store %arg6[%c1_194, %535, %c0_195], %538 {strides = array<i32>} : memref<2x8x64xf32, #tpu.memory_space<vmem>>, vector<1x1x64xf32>,
    %c8_i32_196 = arith.constant 8 : i32
    return
  }
  func.func @transform_0(%arg0: i32, %arg1: memref<16xi32, #tpu.memory_space<smem>>) -> (i32, i32, i32) {
    %c0_i32 = arith.constant 0 : i32
    %c0_i32_0 = arith.constant 0 : i32
    %c0_i32_1 = arith.constant 0 : i32
    return %arg0, %c0_i32, %c0_i32_0 : i32, i32, i32
  }
  func.func @transform_1(%arg0: i32, %arg1: memref<16xi32, #tpu.memory_space<smem>>) -> (i32, i32, i32) {
    %c0_i32 = arith.constant 0 : i32
    %c0_i32_0 = arith.constant 0 : i32
    %c0_i32_1 = arith.constant 0 : i32
    return %arg0, %c0_i32, %c0_i32_0 : i32, i32, i32
  }
  func.func @transform_2(%arg0: i32, %arg1: memref<16xi32, #tpu.memory_space<smem>>) -> (i32, i32) {
    %c0_i32 = arith.constant 0 : i32
    %c0_i32_0 = arith.constant 0 : i32
    %c0_i32_1 = arith.constant 0 : i32
    return %c0_i32, %c0_i32_0 : i32, i32
  }
  func.func @transform_3(%arg0: i32, %arg1: memref<16xi32, #tpu.memory_space<smem>>) -> (i32, i32) {
    %c0_i32 = arith.constant 0 : i32
    %c0_i32_0 = arith.constant 0 : i32
    %c0_i32_1 = arith.constant 0 : i32
    return %c0_i32, %c0_i32_0 : i32, i32
  }
  func.func @transform_4(%arg0: i32, %arg1: memref<16xi32, #tpu.memory_space<smem>>) -> (i32, i32, i32) {
    %c0_i32 = arith.constant 0 : i32
    %c0_i32_0 = arith.constant 0 : i32
    %c0_i32_1 = arith.constant 0 : i32
    return %arg0, %c0_i32, %c0_i32_0 : i32, i32, i32
  }
}

</mosaic_0001>

<llo_original>
// kernel: tpu_custom_call.1
$region0: #{tpu_custom_call.1}
  #allocation0 [shape = 'u32[]', space=smem, size = 0x4, offset = 0x4, fixed_abs, tag = 'smem constant byte address 0x4 - core index']
  #allocation1 [shape = 'u32[72,128]{1,0:T(1,128)}', space=vmem, size = 0x9000, scoped, tag = 'internal scratch']
  #allocation2 [shape = 's32[1]{0}', space=sflag, size = 0x4, scoped, tag = 'scoped memory for tpu_custom_call.1']
  #allocation3 [shape = 'u8[512]{0}', space=smem, size = 0x200, scoped, tag = 'prefetched SMEM operand 0']
  %s0 = inlined_call_operand.hbm [shape: s32[16], index: 0, kind: input, shape index: {}]
  %s1 = inlined_call_operand.hbm [shape: f32[2,8,16], index: 1, kind: input, shape index: {}]
  %s2 = inlined_call_operand.hbm [shape: f32[2,8,8], index: 2, kind: input, shape index: {}]
  %s3 = inlined_call_operand.hbm [shape: f32[48,128], index: 3, kind: input, shape index: {}]
  %s4 = inlined_call_operand.vmem [shape: f32[1,128], index: 4, kind: input, shape index: {}]
  %s5 = inlined_call_operand.hbm [shape: f32[2,8,64], index: 5, kind: output, shape index: {}]
  %s6 = sld [smem:[#allocation0]]
  $region38: #{tpu_custom_call.1} parent=0
    _
  %s8 = ssub.s32 1, %s6
  %s9 = scalar_select 0, %s8, %s6
  %s11 = sshll.u32 %s0, 4
  %s12 = int_to_ptr.hbm [resolvable:$true] %s11
  %14 = dma.hbm_to_smem %s12, 16, [#allocation3], [#allocation2]
  %16 = dma.done [#allocation2], 16
  %17 = sfence
  $region1: #{tpu_custom_call.1} parent=0
    #allocation4 [shape = 'u8[8192]{0}', space=vmem, size = 0x2000, scoped, tag = 'input window, operand 1, single buffered']
    #allocation5 [shape = 's32[1]{0}', space=sflag, size = 0x4, scoped, tag = 'scoped memory for tpu_custom_call.1']
    #allocation6 [shape = 's32[1]{0}', space=sflag, size = 0x4, scoped, tag = 'scoped memory for tpu_custom_call.1']
    #allocation7 [shape = 'u8[8192]{0}', space=vmem, size = 0x2000, scoped, tag = 'input window, operand 2, single buffered']
    #allocation8 [shape = 's32[1]{0}', space=sflag, size = 0x4, scoped, tag = 'scoped memory for tpu_custom_call.1']
    #allocation9 [shape = 'u8[24576]{0}', space=vmem, size = 0x6000, scoped, tag = 'input window, operand 3, single buffered']
    #allocation10 [shape = 'u8[8192]{0}', space=vmem, size = 0x2000, scoped, tag = 'output window, operand 0, single buffered']
    %18 = vsyncpa [#allocation5], 0
    %19 = vsyncpa [#allocation8], 0
    %20 = vsyncpa [#allocation6], 0
    // Predicated region
    $region2: #{tpu_custom_call.1} parent=1 // pred_check
      _
    $region3: #{tpu_custom_call.1} parent=1 // pred_check_branch
      %22 = sbr.rel (0) target = $region5
    $region4: #{tpu_custom_call.1} parent=1 // pred_region
      %24 = vsyncadd [#allocation5], 0
      %s25 = sshll.u32 %s1, 4
      %s26 = int_to_ptr.hbm [resolvable:$true] %s25
      %s27 = sshll.u32 [#allocation4], 4
      %s28 = int_to_ptr.vmem [resolvable:$true] %s27
      %33 = dma.hbm_to_vmem [thread:$0]  %s26, 256, %s28, [#allocation5], 128, 128, 8
    $region5: #{tpu_custom_call.1} parent=1 // pred_fallthru
      _
    // Predicated region
    $region6: #{tpu_custom_call.1} parent=1 // pred_check
      _
    $region7: #{tpu_custom_call.1} parent=1 // pred_check_branch
      %35 = sbr.rel (0) target = $region9
    $region8: #{tpu_custom_call.1} parent=1 // pred_region
      %37 = vsyncadd [#allocation8], 0
      %s38 = sshll.u32 %s2, 4
      %s39 = int_to_ptr.hbm [resolvable:$true] %s38
      %s40 = sshll.u32 [#allocation7], 4
      %s41 = int_to_ptr.vmem [resolvable:$true] %s40
      %46 = dma.hbm_to_vmem [thread:$0]  %s39, 256, %s41, [#allocation8], 128, 128, 8
    $region9: #{tpu_custom_call.1} parent=1 // pred_fallthru
      _
    // Predicated region
    $region10: #{tpu_custom_call.1} parent=1 // pred_check
      _
    $region11: #{tpu_custom_call.1} parent=1 // pred_check_branch
      %48 = sbr.rel (0) target = $region13
    $region12: #{tpu_custom_call.1} parent=1 // pred_region
      %50 = vsyncadd [#allocation8], 0
      %s51 = sshll.u32 %s3, 4
      %s52 = int_to_ptr.hbm [resolvable:$true] %s51
      %s53 = sshll.u32 [#allocation9], 4
      %s54 = int_to_ptr.vmem [resolvable:$true] %s53
      %59 = dma.hbm_to_vmem [thread:$0]  %s52, 768, %s54, [#allocation8], 128, 128, 8
    $region13: #{tpu_custom_call.1} parent=1 // pred_fallthru
      _
    // Predicated region
    $region14: #{tpu_custom_call.1} parent=1 // pred_check
      _
    $region15: #{tpu_custom_call.1} parent=1 // pred_check_branch
      %61 = sbr.rel (0) target = $region17
    $region16: #{tpu_custom_call.1} parent=1 // pred_region
      _
    $region17: #{tpu_custom_call.1} parent=1 // pred_fallthru
      _
    // Predicated region
    $region18: #{tpu_custom_call.1} parent=1 // pred_check
      _
    $region19: #{tpu_custom_call.1} parent=1 // pred_check_branch
      %63 = sbr.rel (0) target = $region21
    $region20: #{tpu_custom_call.1} parent=1 // pred_region
      %65 = dma.done [#allocation5], 256
    $region21: #{tpu_custom_call.1} parent=1 // pred_fallthru
      _
    // Predicated region
    $region22: #{tpu_custom_call.1} parent=1 // pred_check
      _
    $region23: #{tpu_custom_call.1} parent=1 // pred_check_branch
      %67 = sbr.rel (0) target = $region25
    $region24: #{tpu_custom_call.1} parent=1 // pred_region
      %69 = dma.done [#allocation8], 256
    $region25: #{tpu_custom_call.1} parent=1 // pred_fallthru
      _
    // Predicated region
    $region26: #{tpu_custom_call.1} parent=1 // pred_check
      _
    $region27: #{tpu_custom_call.1} parent=1 // pred_check_branch
      %71 = sbr.rel (0) target = $region29
    $region28: #{tpu_custom_call.1} parent=1 // pred_region
      %73 = dma.done [#allocation8], 768
    $region29: #{tpu_custom_call.1} parent=1 // pred_fallthru
      _
    %vm74 = vcmask 523264
    %75 = vst.msk [vmem:[#allocation10] sm:$0xff] %vm74, 0.0
    %76 = vst.msk [vmem:[#allocation10 + $0x8] sm:$0xff] %vm74, 0.0
    %v77 = vld [vmem:[#allocation9] sm:$0xff]
    %v78 = vld [vmem:[#allocation9 + $0x8] sm:$0xff]
    %v79 = vld [vmem:[#allocation9 + $0x10] sm:$0xff]
    %v80 = vld [vmem:[#allocation9 + $0x18] sm:$0xff]
    %v81 = vld [vmem:[#allocation9 + $0x20] sm:$0xff]
    %v82 = vld [vmem:[#allocation9 + $0x28] sm:$0xff]
    %v83 = vld [vmem:[%s4] sm:$0x1]
    %v84 = vlaneseq
    %v85 = vand.u32 %v84, 127
    %vm86 = vcmp.ge.s32.totalorder %v85, 64
    %vm87 = vcmp.lt.s32.totalorder %v85, 96
    %vm88 = vmand %vm86, %vm87
    %s89 = smul.u32 0, 16
    %s90 = sld [smem:[#allocation3 + %s89]]
    %s91 = sadd.s32 %s89, 8
    %s92 = sld [smem:[#allocation3 + %s91]]
    %s93 = scalar_lea.vmem [#allocation4], %s90
    %v94 = vld [vmem:[%s93] sm:$0x1]
    %s95 = scalar_lea.vmem [#allocation7], %s90
    %v96 = vld [vmem:[%s95] sm:$0x1]
    %v97 = vld [vmem:[#allocation10] sm:$0xff]
    %vm98 = vcmask 64512
    %v100 = vsel %vm98, %v96, 0
    %102 = vmatpush.msra.mxu0 0.0
    %103 = vmatpush.msra.mxu0 0.0
    %104 = vmatpush.msra.mxu0 0.0
    %105 = vmatpush.msra.mxu0 0.0
    %106 = vmatpush.msra.mxu0 0.0
    %107 = vmatpush.msra.mxu0 0.0
    %108 = vmatpush.msra.mxu0 0.0
    %109 = vmatpush.msra.mxu0 0.0
    %110 = vmatpush.msra.mxu0 0.0
    %111 = vmatpush.msra.mxu0 0.0
    %112 = vmatpush.msra.mxu0 0.0
    %113 = vmatpush.msra.mxu0 0.0
    %114 = vmatpush.msra.mxu0 0.0
    %115 = vmatpush.msra.mxu0 0.0
    %116 = vmatpush.msra.mxu0 0.0
    %117 = vmatpush.msra.mxu0 %v97
    %118 = vmatmul.f32.gmra.mxu0 %v100
    %v119 = vpop.f32.mrf.mxu0
    %v120 = vadd.f32 0.0, %v119
    %121 = vdwg.mxu0
    %123 = vrot.lane.b32.xlu0 %v120, 112
    %v124 = vpop.permute.xlu0 %123
    %vm126 = vcmask 130048
    %v127 = vsel %vm126, %v94, %v124
    %s128 = sadd.s32 %s92, 8
    %s129 = scalar_lea.vmem [#allocation4], %s128
    %v130 = vld [vmem:[%s129] sm:$0x1]
    %s131 = scalar_lea.vmem [#allocation7], %s128
    %v132 = vld [vmem:[%s131] sm:$0x1]
    %s133 = scalar_lea.vmem [#allocation10], 8
    %v134 = vld [vmem:[%s133] sm:$0xff]
    %v136 = vsel %vm98, %v132, 0
    %138 = vmatpush.msra.mxu0 0.0
    %139 = vmatpush.msra.mxu0 0.0
    %140 = vmatpush.msra.mxu0 0.0
    %141 = vmatpush.msra.mxu0 0.0
    %142 = vmatpush.msra.mxu0 0.0
    %143 = vmatpush.msra.mxu0 0.0
    %144 = vmatpush.msra.mxu0 0.0
    %145 = vmatpush.msra.mxu0 0.0
    %146 = vmatpush.msra.mxu0 0.0
    %147 = vmatpush.msra.mxu0 0.0
    %148 = vmatpush.msra.mxu0 0.0
    %149 = vmatpush.msra.mxu0 0.0
    %150 = vmatpush.msra.mxu0 0.0
    %151 = vmatpush.msra.mxu0 0.0
    %152 = vmatpush.msra.mxu0 0.0
    %153 = vmatpush.msra.mxu0 %v134
    %154 = vmatmul.f32.gmra.mxu0 %v136
    %v155 = vpop.f32.mrf.mxu0
    %v156 = vadd.f32 0.0, %v155
    %157 = vdwg.mxu0
    %159 = vrot.lane.b32.xlu0 %v156, 112
    %v160 = vpop.permute.xlu0 %159
    %v162 = vsel %vm126, %v130, %v160
    %v164 = vrot.slane %v162, 7
    %vm166 = vcmask 1040384
    %v167 = vsel %vm166, %v127, %v164
    %v168 = vrot.slane %v156, 7
    %v170 = vsel %vm166, %v120, %v168
    %v172 = vperm.slane %v83, 0
    %vm174 = vcmask 392192
    %v176 = vsel %vm174, %v167, 0
    %178 = vmatpush.msra.mxu0 0.0
    %179 = vmatpush.msra.mxu0 0.0
    %180 = vmatpush.msra.mxu0 0.0
    %181 = vmatpush.msra.mxu0 0.0
    %182 = vmatpush.msra.mxu0 0.0
    %183 = vmatpush.msra.mxu0 0.0
    %184 = vmatpush.msra.mxu0 0.0
    %185 = vmatpush.msra.mxu0 0.0
    %186 = vmatpush.msra.mxu0 0.0
    %187 = vmatpush.msra.mxu0 0.0
    %188 = vmatpush.msra.mxu0 %v82
    %189 = vmatpush.msra.mxu0 %v81
    %190 = vmatpush.msra.mxu0 %v80
    %191 = vmatpush.msra.mxu0 %v79
    %192 = vmatpush.msra.mxu0 %v78
    %193 = vmatpush.msra.mxu0 %v77
    %194 = vmatmul.f32.gmra.mxu0 %v176
    %v195 = vpop.f32.mrf.mxu0
    %v196 = vadd.f32 %v172, %v195
    %197 = vdwg.mxu0
    %v198 = vtanh.pop %v196
    %v199 = vxor.u32 %v196, 2147483648
    %v200 = vmul.f32 %v199, 1.442695
    %v201 = vpow.pop %v200
    %v202 = vadd.f32 %v201, 1.0
    %v203 = vrcp.pop %v202
    %v204 = vmul.f32 %v202, %v203
    %v205 = vsub.f32 1.0, %v204
    %v206 = vmul.f32 %v203, %v205
    %v207 = vadd.f32 %v203, %v206
    %vm208 = vweird.f32 %v202
    %vm209 = vweird.f32 %v203
    %vm210 = vmor %vm208, %vm209
    %v211 = vsel %vm210, %v203, %v207
    %v212 = vand.u32 2147483647, %v202
    %vm213 = vcmp.eq.f32.partialorder %v212, 8.507059e+37
    %v214 = vand.u32 %v202, 2147483648
    %v215 = vor.u32 1.1754944e-38, %v214
    %v216 = vsel %vm213, %v215, %v211
    %v217 = vmul.f32 1.0, %v216
    %v218 = vsel %vm88, 1, 0
    %vm219 = vcmp.eq.s32.totalorder %v218, 1
    %v220 = vsel %vm219, %v198, %v217
    %222 = vrot.lane.b32.xlu0 %v220, 64
    %v223 = vpop.permute.xlu0 %222
    %v225 = vmul.f32 %v220, %v223
    %227 = vrot.lane.b32.xlu0 %v170, 96
    %v228 = vpop.permute.xlu0 %227
    %v230 = vmul.f32 %v220, %v228
    %232 = vrot.lane.b32.xlu0 %v230, 32
    %v233 = vpop.permute.xlu0 %232
    %v235 = vadd.f32 %v225, %v233
    %v236 = vtanh.pop %v235
    %238 = vrot.lane.b32.xlu0 %v236, 32
    %v239 = vpop.permute.xlu0 %238
    %v241 = vmul.f32 %v220, %v239
    %vm242 = vcmask 261120
    %v243 = vsel %vm242, %v235, %v241
    %s244 = scalar_lea.vmem [#allocation10], %s90
    %vm245 = vcmask 516096
    %246 = vst.msk [vmem:[%s244] sm:$0x1] %vm245, %v243
    %s247 = scalar_lea.vmem [#allocation10], %s128
    %vm248 = vcmask 517121
    %249 = vst.msk [vmem:[%s247 - $0x1] sm:$0x2] %vm248, %v243
    %s250 = sadd.s32 %s89, 1
    %s251 = sld [smem:[#allocation3 + %s250]]
    %s252 = sadd.s32 %s89, 9
    %s253 = sld [smem:[#allocation3 + %s252]]
    %s254 = scalar_lea.vmem [#allocation4], %s251
    %v255 = vld [vmem:[%s254] sm:$0x1]
    %s256 = scalar_lea.vmem [#allocation7], %s251
    %v257 = vld [vmem:[%s256] sm:$0x1]
    %v258 = vld [vmem:[#allocation10] sm:$0xff]
    %v260 = vsel %vm98, %v257, 0
    %262 = vmatpush.msra.mxu0 0.0
    %263 = vmatpush.msra.mxu0 0.0
    %264 = vmatpush.msra.mxu0 0.0
    %265 = vmatpush.msra.mxu0 0.0
    %266 = vmatpush.msra.mxu0 0.0
    %267 = vmatpush.msra.mxu0 0.0
    %268 = vmatpush.msra.mxu0 0.0
    %269 = vmatpush.msra.mxu0 0.0
    %270 = vmatpush.msra.mxu0 0.0
    %271 = vmatpush.msra.mxu0 0.0
    %272 = vmatpush.msra.mxu0 0.0
    %273 = vmatpush.msra.mxu0 0.0
    %274 = vmatpush.msra.mxu0 0.0
    %275 = vmatpush.msra.mxu0 0.0
    %276 = vmatpush.msra.mxu0 0.0
    %277 = vmatpush.msra.mxu0 %v258
    %278 = vmatmul.f32.gmra.mxu0 %v260
    %v279 = vpop.f32.mrf.mxu0
    %v280 = vadd.f32 0.0, %v279
    %281 = vdwg.mxu0
    %283 = vrot.lane.b32.xlu0 %v280, 112
    %v284 = vpop.permute.xlu0 %283
    %v286 = vsel %vm126, %v255, %v284
    %s287 = sadd.s32 %s253, 8
    %s288 = scalar_lea.vmem [#allocation4], %s287
    %v289 = vld [vmem:[%s288] sm:$0x1]
    %s290 = scalar_lea.vmem [#allocation7], %s287
    %v291 = vld [vmem:[%s290] sm:$0x1]
    %v292 = vld [vmem:[%s133] sm:$0xff]
    %v294 = vsel %vm98, %v291, 0
    %296 = vmatpush.msra.mxu0 0.0
    %297 = vmatpush.msra.mxu0 0.0
    %298 = vmatpush.msra.mxu0 0.0
    %299 = vmatpush.msra.mxu0 0.0
    %300 = vmatpush.msra.mxu0 0.0
    %301 = vmatpush.msra.mxu0 0.0
    %302 = vmatpush.msra.mxu0 0.0
    %303 = vmatpush.msra.mxu0 0.0
    %304 = vmatpush.msra.mxu0 0.0
    %305 = vmatpush.msra.mxu0 0.0
    %306 = vmatpush.msra.mxu0 0.0
    %307 = vmatpush.msra.mxu0 0.0
    %308 = vmatpush.msra.mxu0 0.0
    %309 = vmatpush.msra.mxu0 0.0
    %310 = vmatpush.msra.mxu0 0.0
    %311 = vmatpush.msra.mxu0 %v292
    %312 = vmatmul.f32.gmra.mxu0 %v294
    %v313 = vpop.f32.mrf.mxu0
    %v314 = vadd.f32 0.0, %v313
    %315 = vdwg.mxu0
    %317 = vrot.lane.b32.xlu0 %v314, 112
    %v318 = vpop.permute.xlu0 %317
    %v320 = vsel %vm126, %v289, %v318
    %v322 = vrot.slane %v320, 7
    %v324 = vsel %vm166, %v286, %v322
    %v325 = vrot.slane %v314, 7
    %v327 = vsel %vm166, %v280, %v325
    %v329 = vsel %vm174, %v324, 0
    %331 = vmatpush.msra.mxu0 0.0
    %332 = vmatpush.msra.mxu0 0.0
    %333 = vmatpush.msra.mxu0 0.0
    %334 = vmatpush.msra.mxu0 0.0
    %335 = vmatpush.msra.mxu0 0.0
    %336 = vmatpush.msra.mxu0 0.0
    %337 = vmatpush.msra.mxu0 0.0
    %338 = vmatpush.msra.mxu0 0.0
    %339 = vmatpush.msra.mxu0 0.0
    %340 = vmatpush.msra.mxu0 0.0
    %341 = vmatpush.msra.mxu0 %v82
    %342 = vmatpush.msra.mxu0 %v81
    %343 = vmatpush.msra.mxu0 %v80
    %344 = vmatpush.msra.mxu0 %v79
    %345 = vmatpush.msra.mxu0 %v78
    %346 = vmatpush.msra.mxu0 %v77
    %347 = vmatmul.f32.gmra.mxu0 %v329
    %v348 = vpop.f32.mrf.mxu0
    %v349 = vadd.f32 %v172, %v348
    %350 = vdwg.mxu0
    %v351 = vtanh.pop %v349
    %v352 = vxor.u32 %v349, 2147483648
    %v353 = vmul.f32 %v352, 1.442695
    %v354 = vpow.pop %v353
    %v355 = vadd.f32 %v354, 1.0
    %v356 = vrcp.pop %v355
    %v357 = vmul.f32 %v355, %v356
    %v358 = vsub.f32 1.0, %v357
    %v359 = vmul.f32 %v356, %v358
    %v360 = vadd.f32 %v356, %v359
    %vm361 = vweird.f32 %v355
    %vm362 = vweird.f32 %v356
    %vm363 = vmor %vm361, %vm362
    %v364 = vsel %vm363, %v356, %v360
    %v365 = vand.u32 2147483647, %v355
    %vm366 = vcmp.eq.f32.partialorder %v365, 8.507059e+37
    %v367 = vand.u32 %v355, 2147483648
    %v368 = vor.u32 1.1754944e-38, %v367
    %v369 = vsel %vm366, %v368, %v364
    %v370 = vmul.f32 1.0, %v369
    %v371 = vsel %vm219, %v351, %v370
    %373 = vrot.lane.b32.xlu0 %v371, 64
    %v374 = vpop.permute.xlu0 %373
    %v376 = vmul.f32 %v371, %v374
    %378 = vrot.lane.b32.xlu0 %v327, 96
    %v379 = vpop.permute.xlu0 %378
    %v381 = vmul.f32 %v371, %v379
    %383 = vrot.lane.b32.xlu0 %v381, 32
    %v384 = vpop.permute.xlu0 %383
    %v386 = vadd.f32 %v376, %v384
    %v387 = vtanh.pop %v386
    %389 = vrot.lane.b32.xlu0 %v387, 32
    %v390 = vpop.permute.xlu0 %389
    %v392 = vmul.f32 %v371, %v390
    %v393 = vsel %vm242, %v386, %v392
    %s394 = scalar_lea.vmem [#allocation10], %s251
    %395 = vst.msk [vmem:[%s394] sm:$0x1] %vm245, %v393
    %s396 = scalar_lea.vmem [#allocation10], %s287
    %397 = vst.msk [vmem:[%s396 - $0x1] sm:$0x2] %vm248, %v393
    %s398 = sadd.s32 %s89, 2
    %s399 = sld [smem:[#allocation3 + %s398]]
    %s400 = sadd.s32 %s89, 10
    %s401 = sld [smem:[#allocation3 + %s400]]
    %s402 = scalar_lea.vmem [#allocation4], %s399
    %v403 = vld [vmem:[%s402] sm:$0x1]
    %s404 = scalar_lea.vmem [#allocation7], %s399
    %v405 = vld [vmem:[%s404] sm:$0x1]
    %v406 = vld [vmem:[#allocation10] sm:$0xff]
    %v408 = vsel %vm98, %v405, 0
    %410 = vmatpush.msra.mxu0 0.0
    %411 = vmatpush.msra.mxu0 0.0
    %412 = vmatpush.msra.mxu0 0.0
    %413 = vmatpush.msra.mxu0 0.0
    %414 = vmatpush.msra.mxu0 0.0
    %415 = vmatpush.msra.mxu0 0.0
    %416 = vmatpush.msra.mxu0 0.0
    %417 = vmatpush.msra.mxu0 0.0
    %418 = vmatpush.msra.mxu0 0.0
    %419 = vmatpush.msra.mxu0 0.0
    %420 = vmatpush.msra.mxu0 0.0
    %421 = vmatpush.msra.mxu0 0.0
    %422 = vmatpush.msra.mxu0 0.0
    %423 = vmatpush.msra.mxu0 0.0
    %424 = vmatpush.msra.mxu0 0.0
    %425 = vmatpush.msra.mxu0 %v406
    %426 = vmatmul.f32.gmra.mxu0 %v408
    %v427 = vpop.f32.mrf.mxu0
    %v428 = vadd.f32 0.0, %v427
    %429 = vdwg.mxu0
    %431 = vrot.lane.b32.xlu0 %v428, 112
    %v432 = vpop.permute.xlu0 %431
    %v434 = vsel %vm126, %v403, %v432
    %s435 = sadd.s32 %s401, 8
    %s436 = scalar_lea.vmem [#allocation4], %s435
    %v437 = vld [vmem:[%s436] sm:$0x1]
    %s438 = scalar_lea.vmem [#allocation7], %s435
    %v439 = vld [vmem:[%s438] sm:$0x1]
    %v440 = vld [vmem:[%s133] sm:$0xff]
    %v442 = vsel %vm98, %v439, 0
    %444 = vmatpush.msra.mxu0 0.0
    %445 = vmatpush.msra.mxu0 0.0
    %446 = vmatpush.msra.mxu0 0.0
    %447 = vmatpush.msra.mxu0 0.0
    %448 = vmatpush.msra.mxu0 0.0
    %449 = vmatpush.msra.mxu0 0.0
    %450 = vmatpush.msra.mxu0 0.0
    %451 = vmatpush.msra.mxu0 0.0
    %452 = vmatpush.msra.mxu0 0.0
    %453 = vmatpush.msra.mxu0 0.0
    %454 = vmatpush.msra.mxu0 0.0
    %455 = vmatpush.msra.mxu0 0.0
    %456 = vmatpush.msra.mxu0 0.0
    %457 = vmatpush.msra.mxu0 0.0
    %458 = vmatpush.msra.mxu0 0.0
    %459 = vmatpush.msra.mxu0 %v440
    %460 = vmatmul.f32.gmra.mxu0 %v442
    %v461 = vpop.f32.mrf.mxu0
    %v462 = vadd.f32 0.0, %v461
    %463 = vdwg.mxu0
    %465 = vrot.lane.b32.xlu0 %v462, 112
    %v466 = vpop.permute.xlu0 %465
    %v468 = vsel %vm126, %v437, %v466
    %v470 = vrot.slane %v468, 7
    %v472 = vsel %vm166, %v434, %v470
    %v473 = vrot.slane %v462, 7
    %v475 = vsel %vm166, %v428, %v473
    %v477 = vsel %vm174, %v472, 0
    %479 = vmatpush.msra.mxu0 0.0
    %480 = vmatpush.msra.mxu0 0.0
    %481 = vmatpush.msra.mxu0 0.0
    %482 = vmatpush.msra.mxu0 0.0
    %483 = vmatpush.msra.mxu0 0.0
    %484 = vmatpush.msra.mxu0 0.0
    %485 = vmatpush.msra.mxu0 0.0
    %486 = vmatpush.msra.mxu0 0.0
    %487 = vmatpush.msra.mxu0 0.0
    %488 = vmatpush.msra.mxu0 0.0
    %489 = vmatpush.msra.mxu0 %v82
    %490 = vmatpush.msra.mxu0 %v81
    %491 = vmatpush.msra.mxu0 %v80
    %492 = vmatpush.msra.mxu0 %v79
    %493 = vmatpush.msra.mxu0 %v78
    %494 = vmatpush.msra.mxu0 %v77
    %495 = vmatmul.f32.gmra.mxu0 %v477
    %v496 = vpop.f32.mrf.mxu0
    %v497 = vadd.f32 %v172, %v496
    %498 = vdwg.mxu0
    %v499 = vtanh.pop %v497
    %v500 = vxor.u32 %v497, 2147483648
    %v501 = vmul.f32 %v500, 1.442695
    %v502 = vpow.pop %v501
    %v503 = vadd.f32 %v502, 1.0
    %v504 = vrcp.pop %v503
    %v505 = vmul.f32 %v503, %v504
    %v506 = vsub.f32 1.0, %v505
    %v507 = vmul.f32 %v504, %v506
    %v508 = vadd.f32 %v504, %v507
    %vm509 = vweird.f32 %v503
    %vm510 = vweird.f32 %v504
    %vm511 = vmor %vm509, %vm510
    %v512 = vsel %vm511, %v504, %v508
    %v513 = vand.u32 2147483647, %v503
    %vm514 = vcmp.eq.f32.partialorder %v513, 8.507059e+37
    %v515 = vand.u32 %v503, 2147483648
    %v516 = vor.u32 1.1754944e-38, %v515
    %v517 = vsel %vm514, %v516, %v512
    %v518 = vmul.f32 1.0, %v517
    %v519 = vsel %vm219, %v499, %v518
    %521 = vrot.lane.b32.xlu0 %v519, 64
    %v522 = vpop.permute.xlu0 %521
    %v524 = vmul.f32 %v519, %v522
    %526 = vrot.lane.b32.xlu0 %v475, 96
    %v527 = vpop.permute.xlu0 %526
    %v529 = vmul.f32 %v519, %v527
    %531 = vrot.lane.b32.xlu0 %v529, 32
    %v532 = vpop.permute.xlu0 %531
    %v534 = vadd.f32 %v524, %v532
    %v535 = vtanh.pop %v534
    %537 = vrot.lane.b32.xlu0 %v535, 32
    %v538 = vpop.permute.xlu0 %537
    %v540 = vmul.f32 %v519, %v538
    %v541 = vsel %vm242, %v534, %v540
    %s542 = scalar_lea.vmem [#allocation10], %s399
    %543 = vst.msk [vmem:[%s542] sm:$0x1] %vm245, %v541
    %s544 = scalar_lea.vmem [#allocation10], %s435
    %545 = vst.msk [vmem:[%s544 - $0x1] sm:$0x2] %vm248, %v541
    %s546 = sadd.s32 %s89, 3
    %s547 = sld [smem:[#allocation3 + %s546]]
    %s548 = sadd.s32 %s89, 11
    %s549 = sld [smem:[#allocation3 + %s548]]
    %s550 = scalar_lea.vmem [#allocation4], %s547
    %v551 = vld [vmem:[%s550] sm:$0x1]
    %s552 = scalar_lea.vmem [#allocation7], %s547
    %v553 = vld [vmem:[%s552] sm:$0x1]
    %v554 = vld [vmem:[#allocation10] sm:$0xff]
    %v556 = vsel %vm98, %v553, 0
    %558 = vmatpush.msra.mxu0 0.0
    %559 = vmatpush.msra.mxu0 0.0
    %560 = vmatpush.msra.mxu0 0.0
    %561 = vmatpush.msra.mxu0 0.0
    %562 = vmatpush.msra.mxu0 0.0
    %563 = vmatpush.msra.mxu0 0.0
    %564 = vmatpush.msra.mxu0 0.0
    %565 = vmatpush.msra.mxu0 0.0
    %566 = vmatpush.msra.mxu0 0.0
    %567 = vmatpush.msra.mxu0 0.0
    %568 = vmatpush.msra.mxu0 0.0
    %569 = vmatpush.msra.mxu0 0.0
    %570 = vmatpush.msra.mxu0 0.0
    %571 = vmatpush.msra.mxu0 0.0
    %572 = vmatpush.msra.mxu0 0.0
    %573 = vmatpush.msra.mxu0 %v554
    %574 = vmatmul.f32.gmra.mxu0 %v556
    %v575 = vpop.f32.mrf.mxu0
    %v576 = vadd.f32 0.0, %v575
    %577 = vdwg.mxu0
    %579 = vrot.lane.b32.xlu0 %v576, 112
    %v580 = vpop.permute.xlu0 %579
    %v582 = vsel %vm126, %v551, %v580
    %s583 = sadd.s32 %s549, 8
    %s584 = scalar_lea.vmem [#allocation4], %s583
    %v585 = vld [vmem:[%s584] sm:$0x1]
    %s586 = scalar_lea.vmem [#allocation7], %s583
    %v587 = vld [vmem:[%s586] sm:$0x1]
    %v588 = vld [vmem:[%s133] sm:$0xff]
    %v590 = vsel %vm98, %v587, 0
    %592 = vmatpush.msra.mxu0 0.0
    %593 = vmatpush.msra.mxu0 0.0
    %594 = vmatpush.msra.mxu0 0.0
    %595 = vmatpush.msra.mxu0 0.0
    %596 = vmatpush.msra.mxu0 0.0
    %597 = vmatpush.msra.mxu0 0.0
    %598 = vmatpush.msra.mxu0 0.0
    %599 = vmatpush.msra.mxu0 0.0
    %600 = vmatpush.msra.mxu0 0.0
    %601 = vmatpush.msra.mxu0 0.0
    %602 = vmatpush.msra.mxu0 0.0
    %603 = vmatpush.msra.mxu0 0.0
    %604 = vmatpush.msra.mxu0 0.0
    %605 = vmatpush.msra.mxu0 0.0
    %606 = vmatpush.msra.mxu0 0.0
    %607 = vmatpush.msra.mxu0 %v588
    %608 = vmatmul.f32.gmra.mxu0 %v590
    %v609 = vpop.f32.mrf.mxu0
    %v610 = vadd.f32 0.0, %v609
    %611 = vdwg.mxu0
    %613 = vrot.lane.b32.xlu0 %v610, 112
    %v614 = vpop.permute.xlu0 %613
    %v616 = vsel %vm126, %v585, %v614
    %v618 = vrot.slane %v616, 7
    %v620 = vsel %vm166, %v582, %v618
    %v621 = vrot.slane %v610, 7
    %v623 = vsel %vm166, %v576, %v621
    %v625 = vsel %vm174, %v620, 0
    %627 = vmatpush.msra.mxu0 0.0
    %628 = vmatpush.msra.mxu0 0.0
    %629 = vmatpush.msra.mxu0 0.0
    %630 = vmatpush.msra.mxu0 0.0
    %631 = vmatpush.msra.mxu0 0.0
    %632 = vmatpush.msra.mxu0 0.0
    %633 = vmatpush.msra.mxu0 0.0
    %634 = vmatpush.msra.mxu0 0.0
    %635 = vmatpush.msra.mxu0 0.0
    %636 = vmatpush.msra.mxu0 0.0
    %637 = vmatpush.msra.mxu0 %v82
    %638 = vmatpush.msra.mxu0 %v81
    %639 = vmatpush.msra.mxu0 %v80
    %640 = vmatpush.msra.mxu0 %v79
    %641 = vmatpush.msra.mxu0 %v78
    %642 = vmatpush.msra.mxu0 %v77
    %643 = vmatmul.f32.gmra.mxu0 %v625
    %v644 = vpop.f32.mrf.mxu0
    %v645 = vadd.f32 %v172, %v644
    %646 = vdwg.mxu0
    %v647 = vtanh.pop %v645
    %v648 = vxor.u32 %v645, 2147483648
    %v649 = vmul.f32 %v648, 1.442695
    %v650 = vpow.pop %v649
    %v651 = vadd.f32 %v650, 1.0
    %v652 = vrcp.pop %v651
    %v653 = vmul.f32 %v651, %v652
    %v654 = vsub.f32 1.0, %v653
    %v655 = vmul.f32 %v652, %v654
    %v656 = vadd.f32 %v652, %v655
    %vm657 = vweird.f32 %v651
    %vm658 = vweird.f32 %v652
    %vm659 = vmor %vm657, %vm658
    %v660 = vsel %vm659, %v652, %v656
    %v661 = vand.u32 2147483647, %v651
    %vm662 = vcmp.eq.f32.partialorder %v661, 8.507059e+37
    %v663 = vand.u32 %v651, 2147483648
    %v664 = vor.u32 1.1754944e-38, %v663
    %v665 = vsel %vm662, %v664, %v660
    %v666 = vmul.f32 1.0, %v665
    %v667 = vsel %vm219, %v647, %v666
    %669 = vrot.lane.b32.xlu0 %v667, 64
    %v670 = vpop.permute.xlu0 %669
    %v672 = vmul.f32 %v667, %v670
    %674 = vrot.lane.b32.xlu0 %v623, 96
    %v675 = vpop.permute.xlu0 %674
    %v677 = vmul.f32 %v667, %v675
    %679 = vrot.lane.b32.xlu0 %v677, 32
    %v680 = vpop.permute.xlu0 %679
    %v682 = vadd.f32 %v672, %v680
    %v683 = vtanh.pop %v682
    %685 = vrot.lane.b32.xlu0 %v683, 32
    %v686 = vpop.permute.xlu0 %685
    %v688 = vmul.f32 %v667, %v686
    %v689 = vsel %vm242, %v682, %v688
    %s690 = scalar_lea.vmem [#allocation10], %s547
    %691 = vst.msk [vmem:[%s690] sm:$0x1] %vm245, %v689
    %s692 = scalar_lea.vmem [#allocation10], %s583
    %693 = vst.msk [vmem:[%s692 - $0x1] sm:$0x2] %vm248, %v689
    %s694 = sadd.s32 %s89, 4
    %s695 = sld [smem:[#allocation3 + %s694]]
    %s696 = sadd.s32 %s89, 12
    %s697 = sld [smem:[#allocation3 + %s696]]
    %s698 = scalar_lea.vmem [#allocation4], %s695
    %v699 = vld [vmem:[%s698] sm:$0x1]
    %s700 = scalar_lea.vmem [#allocation7], %s695
    %v701 = vld [vmem:[%s700] sm:$0x1]
    %v702 = vld [vmem:[#allocation10] sm:$0xff]
    %v704 = vsel %vm98, %v701, 0
    %706 = vmatpush.msra.mxu0 0.0
    %707 = vmatpush.msra.mxu0 0.0
    %708 = vmatpush.msra.mxu0 0.0
    %709 = vmatpush.msra.mxu0 0.0
    %710 = vmatpush.msra.mxu0 0.0
    %711 = vmatpush.msra.mxu0 0.0
    %712 = vmatpush.msra.mxu0 0.0
    %713 = vmatpush.msra.mxu0 0.0
    %714 = vmatpush.msra.mxu0 0.0
    %715 = vmatpush.msra.mxu0 0.0
    %716 = vmatpush.msra.mxu0 0.0
    %717 = vmatpush.msra.mxu0 0.0
    %718 = vmatpush.msra.mxu0 0.0
    %719 = vmatpush.msra.mxu0 0.0
    %720 = vmatpush.msra.mxu0 0.0
    %721 = vmatpush.msra.mxu0 %v702
    %722 = vmatmul.f32.gmra.mxu0 %v704
    %v723 = vpop.f32.mrf.mxu0
    %v724 = vadd.f32 0.0, %v723
    %725 = vdwg.mxu0
    %727 = vrot.lane.b32.xlu0 %v724, 112
    %v728 = vpop.permute.xlu0 %727
    %v730 = vsel %vm126, %v699, %v728
    %s731 = sadd.s32 %s697, 8
    %s732 = scalar_lea.vmem [#allocation4], %s731
    %v733 = vld [vmem:[%s732] sm:$0x1]
    %s734 = scalar_lea.vmem [#allocation7], %s731
    %v735 = vld [vmem:[%s734] sm:$0x1]
    %v736 = vld [vmem:[%s133] sm:$0xff]
    %v738 = vsel %vm98, %v735, 0
    %740 = vmatpush.msra.mxu0 0.0
    %741 = vmatpush.msra.mxu0 0.0
    %742 = vmatpush.msra.mxu0 0.0
    %743 = vmatpush.msra.mxu0 0.0
    %744 = vmatpush.msra.mxu0 0.0
    %745 = vmatpush.msra.mxu0 0.0
    %746 = vmatpush.msra.mxu0 0.0
    %747 = vmatpush.msra.mxu0 0.0
    %748 = vmatpush.msra.mxu0 0.0
    %749 = vmatpush.msra.mxu0 0.0
    %750 = vmatpush.msra.mxu0 0.0
    %751 = vmatpush.msra.mxu0 0.0
    %752 = vmatpush.msra.mxu0 0.0
    %753 = vmatpush.msra.mxu0 0.0
    %754 = vmatpush.msra.mxu0 0.0
    %755 = vmatpush.msra.mxu0 %v736
    %756 = vmatmul.f32.gmra.mxu0 %v738
    %v757 = vpop.f32.mrf.mxu0
    %v758 = vadd.f32 0.0, %v757
    %759 = vdwg.mxu0
    %761 = vrot.lane.b32.xlu0 %v758, 112
    %v762 = vpop.permute.xlu0 %761
    %v764 = vsel %vm126, %v733, %v762
    %v766 = vrot.slane %v764, 7
    %v768 = vsel %vm166, %v730, %v766
    %v769 = vrot.slane %v758, 7
    %v771 = vsel %vm166, %v724, %v769
    %v773 = vsel %vm174, %v768, 0
    %775 = vmatpush.msra.mxu0 0.0
    %776 = vmatpush.msra.mxu0 0.0
    %777 = vmatpush.msra.mxu0 0.0
    %778 = vmatpush.msra.mxu0 0.0
    %779 = vmatpush.msra.mxu0 0.0
    %780 = vmatpush.msra.mxu0 0.0
    %781 = vmatpush.msra.mxu0 0.0
    %782 = vmatpush.msra.mxu0 0.0
    %783 = vmatpush.msra.mxu0 0.0
    %784 = vmatpush.msra.mxu0 0.0
    %785 = vmatpush.msra.mxu0 %v82
    %786 = vmatpush.msra.mxu0 %v81
    %787 = vmatpush.msra.mxu0 %v80
    %788 = vmatpush.msra.mxu0 %v79
    %789 = vmatpush.msra.mxu0 %v78
    %790 = vmatpush.msra.mxu0 %v77
    %791 = vmatmul.f32.gmra.mxu0 %v773
    %v792 = vpop.f32.mrf.mxu0
    %v793 = vadd.f32 %v172, %v792
    %794 = vdwg.mxu0
    %v795 = vtanh.pop %v793
    %v796 = vxor.u32 %v793, 2147483648
    %v797 = vmul.f32 %v796, 1.442695
    %v798 = vpow.pop %v797
    %v799 = vadd.f32 %v798, 1.0
    %v800 = vrcp.pop %v799
    %v801 = vmul.f32 %v799, %v800
    %v802 = vsub.f32 1.0, %v801
    %v803 = vmul.f32 %v800, %v802
    %v804 = vadd.f32 %v800, %v803
    %vm805 = vweird.f32 %v799
    %vm806 = vweird.f32 %v800
    %vm807 = vmor %vm805, %vm806
    %v808 = vsel %vm807, %v800, %v804
    %v809 = vand.u32 2147483647, %v799
    %vm810 = vcmp.eq.f32.partialorder %v809, 8.507059e+37
    %v811 = vand.u32 %v799, 2147483648
    %v812 = vor.u32 1.1754944e-38, %v811
    %v813 = vsel %vm810, %v812, %v808
    %v814 = vmul.f32 1.0, %v813
    %v815 = vsel %vm219, %v795, %v814
    %817 = vrot.lane.b32.xlu0 %v815, 64
    %v818 = vpop.permute.xlu0 %817
    %v820 = vmul.f32 %v815, %v818
    %822 = vrot.lane.b32.xlu0 %v771, 96
    %v823 = vpop.permute.xlu0 %822
    %v825 = vmul.f32 %v815, %v823
    %827 = vrot.lane.b32.xlu0 %v825, 32
    %v828 = vpop.permute.xlu0 %827
    %v830 = vadd.f32 %v820, %v828
    %v831 = vtanh.pop %v830
    %833 = vrot.lane.b32.xlu0 %v831, 32
    %v834 = vpop.permute.xlu0 %833
    %v836 = vmul.f32 %v815, %v834
    %v837 = vsel %vm242, %v830, %v836
    %s838 = scalar_lea.vmem [#allocation10], %s695
    %839 = vst.msk [vmem:[%s838] sm:$0x1] %vm245, %v837
    %s840 = scalar_lea.vmem [#allocation10], %s731
    %841 = vst.msk [vmem:[%s840 - $0x1] sm:$0x2] %vm248, %v837
    %s842 = sadd.s32 %s89, 5
    %s843 = sld [smem:[#allocation3 + %s842]]
    %s844 = sadd.s32 %s89, 13
    %s845 = sld [smem:[#allocation3 + %s844]]
    %s846 = scalar_lea.vmem [#allocation4], %s843
    %v847 = vld [vmem:[%s846] sm:$0x1]
    %s848 = scalar_lea.vmem [#allocation7], %s843
    %v849 = vld [vmem:[%s848] sm:$0x1]
    %v850 = vld [vmem:[#allocation10] sm:$0xff]
    %v852 = vsel %vm98, %v849, 0
    %854 = vmatpush.msra.mxu0 0.0
    %855 = vmatpush.msra.mxu0 0.0
    %856 = vmatpush.msra.mxu0 0.0
    %857 = vmatpush.msra.mxu0 0.0
    %858 = vmatpush.msra.mxu0 0.0
    %859 = vmatpush.msra.mxu0 0.0
    %860 = vmatpush.msra.mxu0 0.0
    %861 = vmatpush.msra.mxu0 0.0
    %862 = vmatpush.msra.mxu0 0.0
    %863 = vmatpush.msra.mxu0 0.0
    %864 = vmatpush.msra.mxu0 0.0
    %865 = vmatpush.msra.mxu0 0.0
    %866 = vmatpush.msra.mxu0 0.0
    %867 = vmatpush.msra.mxu0 0.0
    %868 = vmatpush.msra.mxu0 0.0
    %869 = vmatpush.msra.mxu0 %v850
    %870 = vmatmul.f32.gmra.mxu0 %v852
    %v871 = vpop.f32.mrf.mxu0
    %v872 = vadd.f32 0.0, %v871
    %873 = vdwg.mxu0
    %875 = vrot.lane.b32.xlu0 %v872, 112
    %v876 = vpop.permute.xlu0 %875
    %v878 = vsel %vm126, %v847, %v876
    %s879 = sadd.s32 %s845, 8
    %s880 = scalar_lea.vmem [#allocation4], %s879
    %v881 = vld [vmem:[%s880] sm:$0x1]
    %s882 = scalar_lea.vmem [#allocation7], %s879
    %v883 = vld [vmem:[%s882] sm:$0x1]
    %v884 = vld [vmem:[%s133] sm:$0xff]
    %v886 = vsel %vm98, %v883, 0
    %888 = vmatpush.msra.mxu0 0.0
    %889 = vmatpush.msra.mxu0 0.0
    %890 = vmatpush.msra.mxu0 0.0
    %891 = vmatpush.msra.mxu0 0.0
    %892 = vmatpush.msra.mxu0 0.0
    %893 = vmatpush.msra.mxu0 0.0
    %894 = vmatpush.msra.mxu0 0.0
    %895 = vmatpush.msra.mxu0 0.0
    %896 = vmatpush.msra.mxu0 0.0
    %897 = vmatpush.msra.mxu0 0.0
    %898 = vmatpush.msra.mxu0 0.0
    %899 = vmatpush.msra.mxu0 0.0
    %900 = vmatpush.msra.mxu0 0.0
    %901 = vmatpush.msra.mxu0 0.0
    %902 = vmatpush.msra.mxu0 0.0
    %903 = vmatpush.msra.mxu0 %v884
    %904 = vmatmul.f32.gmra.mxu0 %v886
    %v905 = vpop.f32.mrf.mxu0
    %v906 = vadd.f32 0.0, %v905
    %907 = vdwg.mxu0
    %909 = vrot.lane.b32.xlu0 %v906, 112
    %v910 = vpop.permute.xlu0 %909
    %v912 = vsel %vm126, %v881, %v910
    %v914 = vrot.slane %v912, 7
    %v916 = vsel %vm166, %v878, %v914
    %v917 = vrot.slane %v906, 7
    %v919 = vsel %vm166, %v872, %v917
    %v921 = vsel %vm174, %v916, 0
    %923 = vmatpush.msra.mxu0 0.0
    %924 = vmatpush.msra.mxu0 0.0
    %925 = vmatpush.msra.mxu0 0.0
    %926 = vmatpush.msra.mxu0 0.0
    %927 = vmatpush.msra.mxu0 0.0
    %928 = vmatpush.msra.mxu0 0.0
    %929 = vmatpush.msra.mxu0 0.0
    %930 = vmatpush.msra.mxu0 0.0
    %931 = vmatpush.msra.mxu0 0.0
    %932 = vmatpush.msra.mxu0 0.0
    %933 = vmatpush.msra.mxu0 %v82
    %934 = vmatpush.msra.mxu0 %v81
    %935 = vmatpush.msra.mxu0 %v80
    %936 = vmatpush.msra.mxu0 %v79
    %937 = vmatpush.msra.mxu0 %v78
    %938 = vmatpush.msra.mxu0 %v77
    %939 = vmatmul.f32.gmra.mxu0 %v921
    %v940 = vpop.f32.mrf.mxu0
    %v941 = vadd.f32 %v172, %v940
    %942 = vdwg.mxu0
    %v943 = vtanh.pop %v941
    %v944 = vxor.u32 %v941, 2147483648
    %v945 = vmul.f32 %v944, 1.442695
    %v946 = vpow.pop %v945
    %v947 = vadd.f32 %v946, 1.0
    %v948 = vrcp.pop %v947
    %v949 = vmul.f32 %v947, %v948
    %v950 = vsub.f32 1.0, %v949
    %v951 = vmul.f32 %v948, %v950
    %v952 = vadd.f32 %v948, %v951
    %vm953 = vweird.f32 %v947
    %vm954 = vweird.f32 %v948
    %vm955 = vmor %vm953, %vm954
    %v956 = vsel %vm955, %v948, %v952
    %v957 = vand.u32 2147483647, %v947
    %vm958 = vcmp.eq.f32.partialorder %v957, 8.507059e+37
    %v959 = vand.u32 %v947, 2147483648
    %v960 = vor.u32 1.1754944e-38, %v959
    %v961 = vsel %vm958, %v960, %v956
    %v962 = vmul.f32 1.0, %v961
    %v963 = vsel %vm219, %v943, %v962
    %965 = vrot.lane.b32.xlu0 %v963, 64
    %v966 = vpop.permute.xlu0 %965
    %v968 = vmul.f32 %v963, %v966
    %970 = vrot.lane.b32.xlu0 %v919, 96
    %v971 = vpop.permute.xlu0 %970
    %v973 = vmul.f32 %v963, %v971
    %975 = vrot.lane.b32.xlu0 %v973, 32
    %v976 = vpop.permute.xlu0 %975
    %v978 = vadd.f32 %v968, %v976
    %v979 = vtanh.pop %v978
    %981 = vrot.lane.b32.xlu0 %v979, 32
    %v982 = vpop.permute.xlu0 %981
    %v984 = vmul.f32 %v963, %v982
    %v985 = vsel %vm242, %v978, %v984
    %s986 = scalar_lea.vmem [#allocation10], %s843
    %987 = vst.msk [vmem:[%s986] sm:$0x1] %vm245, %v985
    %s988 = scalar_lea.vmem [#allocation10], %s879
    %989 = vst.msk [vmem:[%s988 - $0x1] sm:$0x2] %vm248, %v985
    %s990 = sadd.s32 %s89, 6
    %s991 = sld [smem:[#allocation3 + %s990]]
    %s992 = sadd.s32 %s89, 14
    %s993 = sld [smem:[#allocation3 + %s992]]
    %s994 = scalar_lea.vmem [#allocation4], %s991
    %v995 = vld [vmem:[%s994] sm:$0x1]
    %s996 = scalar_lea.vmem [#allocation7], %s991
    %v997 = vld [vmem:[%s996] sm:$0x1]
    %v998 = vld [vmem:[#allocation10] sm:$0xff]
    %v1000 = vsel %vm98, %v997, 0
    %1002 = vmatpush.msra.mxu0 0.0
    %1003 = vmatpush.msra.mxu0 0.0
    %1004 = vmatpush.msra.mxu0 0.0
    %1005 = vmatpush.msra.mxu0 0.0
    %1006 = vmatpush.msra.mxu0 0.0
    %1007 = vmatpush.msra.mxu0 0.0
    %1008 = vmatpush.msra.mxu0 0.0
    %1009 = vmatpush.msra.mxu0 0.0
    %1010 = vmatpush.msra.mxu0 0.0
    %1011 = vmatpush.msra.mxu0 0.0
    %1012 = vmatpush.msra.mxu0 0.0
    %1013 = vmatpush.msra.mxu0 0.0
    %1014 = vmatpush.msra.mxu0 0.0
    %1015 = vmatpush.msra.mxu0 0.0
    %1016 = vmatpush.msra.mxu0 0.0
    %1017 = vmatpush.msra.mxu0 %v998
    %1018 = vmatmul.f32.gmra.mxu0 %v1000
    %v1019 = vpop.f32.mrf.mxu0
    %v1020 = vadd.f32 0.0, %v1019
    %1021 = vdwg.mxu0
    %1023 = vrot.lane.b32.xlu0 %v1020, 112
    %v1024 = vpop.permute.xlu0 %1023
    %v1026 = vsel %vm126, %v995, %v1024
    %s1027 = sadd.s32 %s993, 8
    %s1028 = scalar_lea.vmem [#allocation4], %s1027
    %v1029 = vld [vmem:[%s1028] sm:$0x1]
    %s1030 = scalar_lea.vmem [#allocation7], %s1027
    %v1031 = vld [vmem:[%s1030] sm:$0x1]
    %v1032 = vld [vmem:[%s133] sm:$0xff]
    %v1034 = vsel %vm98, %v1031, 0
    %1036 = vmatpush.msra.mxu0 0.0
    %1037 = vmatpush.msra.mxu0 0.0
    %1038 = vmatpush.msra.mxu0 0.0
    %1039 = vmatpush.msra.mxu0 0.0
    %1040 = vmatpush.msra.mxu0 0.0
    %1041 = vmatpush.msra.mxu0 0.0
    %1042 = vmatpush.msra.mxu0 0.0
    %1043 = vmatpush.msra.mxu0 0.0
    %1044 = vmatpush.msra.mxu0 0.0
    %1045 = vmatpush.msra.mxu0 0.0
    %1046 = vmatpush.msra.mxu0 0.0
    %1047 = vmatpush.msra.mxu0 0.0
    %1048 = vmatpush.msra.mxu0 0.0
    %1049 = vmatpush.msra.mxu0 0.0
    %1050 = vmatpush.msra.mxu0 0.0
    %1051 = vmatpush.msra.mxu0 %v1032
    %1052 = vmatmul.f32.gmra.mxu0 %v1034
    %v1053 = vpop.f32.mrf.mxu0
    %v1054 = vadd.f32 0.0, %v1053
    %1055 = vdwg.mxu0
    %1057 = vrot.lane.b32.xlu0 %v1054, 112
    %v1058 = vpop.permute.xlu0 %1057
    %v1060 = vsel %vm126, %v1029, %v1058
    %v1062 = vrot.slane %v1060, 7
    %v1064 = vsel %vm166, %v1026, %v1062
    %v1065 = vrot.slane %v1054, 7
    %v1067 = vsel %vm166, %v1020, %v1065
    %v1069 = vsel %vm174, %v1064, 0
    %1071 = vmatpush.msra.mxu0 0.0
    %1072 = vmatpush.msra.mxu0 0.0
    %1073 = vmatpush.msra.mxu0 0.0
    %1074 = vmatpush.msra.mxu0 0.0
    %1075 = vmatpush.msra.mxu0 0.0
    %1076 = vmatpush.msra.mxu0 0.0
    %1077 = vmatpush.msra.mxu0 0.0
    %1078 = vmatpush.msra.mxu0 0.0
    %1079 = vmatpush.msra.mxu0 0.0
    %1080 = vmatpush.msra.mxu0 0.0
    %1081 = vmatpush.msra.mxu0 %v82
    %1082 = vmatpush.msra.mxu0 %v81
    %1083 = vmatpush.msra.mxu0 %v80
    %1084 = vmatpush.msra.mxu0 %v79
    %1085 = vmatpush.msra.mxu0 %v78
    %1086 = vmatpush.msra.mxu0 %v77
    %1087 = vmatmul.f32.gmra.mxu0 %v1069
    %v1088 = vpop.f32.mrf.mxu0
    %v1089 = vadd.f32 %v172, %v1088
    %1090 = vdwg.mxu0
    %v1091 = vtanh.pop %v1089
    %v1092 = vxor.u32 %v1089, 2147483648
    %v1093 = vmul.f32 %v1092, 1.442695
    %v1094 = vpow.pop %v1093
    %v1095 = vadd.f32 %v1094, 1.0
    %v1096 = vrcp.pop %v1095
    %v1097 = vmul.f32 %v1095, %v1096
    %v1098 = vsub.f32 1.0, %v1097
    %v1099 = vmul.f32 %v1096, %v1098
    %v1100 = vadd.f32 %v1096, %v1099
    %vm1101 = vweird.f32 %v1095
    %vm1102 = vweird.f32 %v1096
    %vm1103 = vmor %vm1101, %vm1102
    %v1104 = vsel %vm1103, %v1096, %v1100
    %v1105 = vand.u32 2147483647, %v1095
    %vm1106 = vcmp.eq.f32.partialorder %v1105, 8.507059e+37
    %v1107 = vand.u32 %v1095, 2147483648
    %v1108 = vor.u32 1.1754944e-38, %v1107
    %v1109 = vsel %vm1106, %v1108, %v1104
    %v1110 = vmul.f32 1.0, %v1109
    %v1111 = vsel %vm219, %v1091, %v1110
    %1113 = vrot.lane.b32.xlu0 %v1111, 64
    %v1114 = vpop.permute.xlu0 %1113
    %v1116 = vmul.f32 %v1111, %v1114
    %1118 = vrot.lane.b32.xlu0 %v1067, 96
    %v1119 = vpop.permute.xlu0 %1118
    %v1121 = vmul.f32 %v1111, %v1119
    %1123 = vrot.lane.b32.xlu0 %v1121, 32
    %v1124 = vpop.permute.xlu0 %1123
    %v1126 = vadd.f32 %v1116, %v1124
    %v1127 = vtanh.pop %v1126
    %1129 = vrot.lane.b32.xlu0 %v1127, 32
    %v1130 = vpop.permute.xlu0 %1129
    %v1132 = vmul.f32 %v1111, %v1130
    %v1133 = vsel %vm242, %v1126, %v1132
    %s1134 = scalar_lea.vmem [#allocation10], %s991
    %1135 = vst.msk [vmem:[%s1134] sm:$0x1] %vm245, %v1133
    %s1136 = scalar_lea.vmem [#allocation10], %s1027
    %1137 = vst.msk [vmem:[%s1136 - $0x1] sm:$0x2] %vm248, %v1133
    %s1138 = sadd.s32 %s89, 7
    %s1139 = sld [smem:[#allocation3 + %s1138]]
    %s1140 = sadd.s32 %s89, 15
    %s1141 = sld [smem:[#allocation3 + %s1140]]
    %s1142 = scalar_lea.vmem [#allocation4], %s1139
    %v1143 = vld [vmem:[%s1142] sm:$0x1]
    %s1144 = scalar_lea.vmem [#allocation7], %s1139
    %v1145 = vld [vmem:[%s1144] sm:$0x1]
    %v1146 = vld [vmem:[#allocation10] sm:$0xff]
    %v1148 = vsel %vm98, %v1145, 0
    %1150 = vmatpush.msra.mxu0 0.0
    %1151 = vmatpush.msra.mxu0 0.0
    %1152 = vmatpush.msra.mxu0 0.0
    %1153 = vmatpush.msra.mxu0 0.0
    %1154 = vmatpush.msra.mxu0 0.0
    %1155 = vmatpush.msra.mxu0 0.0
    %1156 = vmatpush.msra.mxu0 0.0
    %1157 = vmatpush.msra.mxu0 0.0
    %1158 = vmatpush.msra.mxu0 0.0
    %1159 = vmatpush.msra.mxu0 0.0
    %1160 = vmatpush.msra.mxu0 0.0
    %1161 = vmatpush.msra.mxu0 0.0
    %1162 = vmatpush.msra.mxu0 0.0
    %1163 = vmatpush.msra.mxu0 0.0
    %1164 = vmatpush.msra.mxu0 0.0
    %1165 = vmatpush.msra.mxu0 %v1146
    %1166 = vmatmul.f32.gmra.mxu0 %v1148
    %v1167 = vpop.f32.mrf.mxu0
    %v1168 = vadd.f32 0.0, %v1167
    %1169 = vdwg.mxu0
    %1171 = vrot.lane.b32.xlu0 %v1168, 112
    %v1172 = vpop.permute.xlu0 %1171
    %v1174 = vsel %vm126, %v1143, %v1172
    %s1175 = sadd.s32 %s1141, 8
    %s1176 = scalar_lea.vmem [#allocation4], %s1175
    %v1177 = vld [vmem:[%s1176] sm:$0x1]
    %s1178 = scalar_lea.vmem [#allocation7], %s1175
    %v1179 = vld [vmem:[%s1178] sm:$0x1]
    %v1180 = vld [vmem:[%s133] sm:$0xff]
    %v1182 = vsel %vm98, %v1179, 0
    %1184 = vmatpush.msra.mxu0 0.0
    %1185 = vmatpush.msra.mxu0 0.0
    %1186 = vmatpush.msra.mxu0 0.0
    %1187 = vmatpush.msra.mxu0 0.0
    %1188 = vmatpush.msra.mxu0 0.0
    %1189 = vmatpush.msra.mxu0 0.0
    %1190 = vmatpush.msra.mxu0 0.0
    %1191 = vmatpush.msra.mxu0 0.0
    %1192 = vmatpush.msra.mxu0 0.0
    %1193 = vmatpush.msra.mxu0 0.0
    %1194 = vmatpush.msra.mxu0 0.0
    %1195 = vmatpush.msra.mxu0 0.0
    %1196 = vmatpush.msra.mxu0 0.0
    %1197 = vmatpush.msra.mxu0 0.0
    %1198 = vmatpush.msra.mxu0 0.0
    %1199 = vmatpush.msra.mxu0 %v1180
    %1200 = vmatmul.f32.gmra.mxu0 %v1182
    %v1201 = vpop.f32.mrf.mxu0
    %v1202 = vadd.f32 0.0, %v1201
    %1203 = vdwg.mxu0
    %1205 = vrot.lane.b32.xlu0 %v1202, 112
    %v1206 = vpop.permute.xlu0 %1205
    %v1208 = vsel %vm126, %v1177, %v1206
    %v1210 = vrot.slane %v1208, 7
    %v1212 = vsel %vm166, %v1174, %v1210
    %v1213 = vrot.slane %v1202, 7
    %v1215 = vsel %vm166, %v1168, %v1213
    %v1217 = vsel %vm174, %v1212, 0
    %1219 = vmatpush.msra.mxu0 0.0
    %1220 = vmatpush.msra.mxu0 0.0
    %1221 = vmatpush.msra.mxu0 0.0
    %1222 = vmatpush.msra.mxu0 0.0
    %1223 = vmatpush.msra.mxu0 0.0
    %1224 = vmatpush.msra.mxu0 0.0
    %1225 = vmatpush.msra.mxu0 0.0
    %1226 = vmatpush.msra.mxu0 0.0
    %1227 = vmatpush.msra.mxu0 0.0
    %1228 = vmatpush.msra.mxu0 0.0
    %1229 = vmatpush.msra.mxu0 %v82
    %1230 = vmatpush.msra.mxu0 %v81
    %1231 = vmatpush.msra.mxu0 %v80
    %1232 = vmatpush.msra.mxu0 %v79
    %1233 = vmatpush.msra.mxu0 %v78
    %1234 = vmatpush.msra.mxu0 %v77
    %1235 = vmatmul.f32.gmra.mxu0 %v1217
    %v1236 = vpop.f32.mrf.mxu0
    %v1237 = vadd.f32 %v172, %v1236
    %1238 = vdwg.mxu0
    %v1239 = vtanh.pop %v1237
    %v1240 = vxor.u32 %v1237, 2147483648
    %v1241 = vmul.f32 %v1240, 1.442695
    %v1242 = vpow.pop %v1241
    %v1243 = vadd.f32 %v1242, 1.0
    %v1244 = vrcp.pop %v1243
    %v1245 = vmul.f32 %v1243, %v1244
    %v1246 = vsub.f32 1.0, %v1245
    %v1247 = vmul.f32 %v1244, %v1246
    %v1248 = vadd.f32 %v1244, %v1247
    %vm1249 = vweird.f32 %v1243
    %vm1250 = vweird.f32 %v1244
    %vm1251 = vmor %vm1249, %vm1250
    %v1252 = vsel %vm1251, %v1244, %v1248
    %v1253 = vand.u32 2147483647, %v1243
    %vm1254 = vcmp.eq.f32.partialorder %v1253, 8.507059e+37
    %v1255 = vand.u32 %v1243, 2147483648
    %v1256 = vor.u32 1.1754944e-38, %v1255
    %v1257 = vsel %vm1254, %v1256, %v1252
    %v1258 = vmul.f32 1.0, %v1257
    %v1259 = vsel %vm219, %v1239, %v1258
    %1261 = vrot.lane.b32.xlu0 %v1259, 64
    %v1262 = vpop.permute.xlu0 %1261
    %v1264 = vmul.f32 %v1259, %v1262
    %1266 = vrot.lane.b32.xlu0 %v1215, 96
    %v1267 = vpop.permute.xlu0 %1266
    %v1269 = vmul.f32 %v1259, %v1267
    %1271 = vrot.lane.b32.xlu0 %v1269, 32
    %v1272 = vpop.permute.xlu0 %1271
    %v1274 = vadd.f32 %v1264, %v1272
    %v1275 = vtanh.pop %v1274
    %1277 = vrot.lane.b32.xlu0 %v1275, 32
    %v1278 = vpop.permute.xlu0 %1277
    %v1280 = vmul.f32 %v1259, %v1278
    %v1281 = vsel %vm242, %v1274, %v1280
    %s1282 = scalar_lea.vmem [#allocation10], %s1139
    %1283 = vst.msk [vmem:[%s1282] sm:$0x1] %vm245, %v1281
    %s1284 = scalar_lea.vmem [#allocation10], %s1175
    %1285 = vst.msk [vmem:[%s1284 - $0x1] sm:$0x2] %vm248, %v1281
    // Predicated region
    $region30: #{tpu_custom_call.1} parent=1 // pred_check
      _
    $region31: #{tpu_custom_call.1} parent=1 // pred_check_branch
      %1287 = sbr.rel (0) target = $region33
    $region32: #{tpu_custom_call.1} parent=1 // pred_region
      %1289 = vsyncadd [#allocation6], 0
      %s1290 = sshll.u32 [#allocation10], 4
      %s1291 = int_to_ptr.vmem [resolvable:$true] %s1290
      %s1292 = sshll.u32 %s5, 4
      %s1293 = int_to_ptr.hbm [resolvable:$true] %s1292
      %1298 = dma.vmem_to_hbm [thread:$0]  %s1291, 256, %s1293, [#allocation6], 128, 128, 8
    $region33: #{tpu_custom_call.1} parent=1 // pred_fallthru
      _
    // Predicated region
    $region34: #{tpu_custom_call.1} parent=1 // pred_check
      _
    $region35: #{tpu_custom_call.1} parent=1 // pred_check_branch
      %1300 = sbr.rel (0) target = $region37
    $region36: #{tpu_custom_call.1} parent=1 // pred_region
      %1302 = dma.done [#allocation6], 256
    $region37: #{tpu_custom_call.1} parent=1 // pred_fallthru
      _
    %1303 = vsyncpa [#allocation5], 1
    %1304 = vsyncpa [#allocation8], 1
    %1305 = vsyncpa [#allocation6], 1

</llo_original>
